<compile_context>
chip_gen: v6e
topology: v6e:2x2x1
jax: 0.10.0
libtpu: 0.0.40
codegen_flags: <defaults>
</compile_context>

<pallas_src>
import functools

import jax
import jax.numpy as jnp
from jax import lax
from jax.experimental import pallas as pl
from jax.experimental.pallas import tpu as pltpu


# ---------------------------------------------------------------------------
# Generic (M,K) x (K,N) + bias matmul kernel, grid over lane-aligned N tiles.
# Used for (a) the hoisted LSTM input projection and (b) the decoder Linear.
# ---------------------------------------------------------------------------
def _matmul_bias_kernel(x_ref, w_ref, b_ref, o_ref):
    o_ref[...] = (jnp.dot(x_ref[...], w_ref[...],
                          preferred_element_type=jnp.float32)
                  + b_ref[...])


def matmul_bias(x, w, b, *, tile_n=128):
    """x: (M, K) bf16/f32, w: (K, N), b: (1, N) f32 -> f32 (M, N).

    N is zero-padded internally to a multiple of `tile_n` so that each output
    block is lane-dense (unmasked stores); the pad is sliced off on return.
    """
    M, K = x.shape
    N = w.shape[1]
    n_pad = ((N + tile_n - 1) // tile_n) * tile_n
    if n_pad != N:
        w = jnp.pad(w, ((0, 0), (0, n_pad - N)))
        b = jnp.pad(b, ((0, 0), (0, n_pad - N)))

    out = pl.pallas_call(
        _matmul_bias_kernel,
        out_shape=jax.ShapeDtypeStruct((M, n_pad), jnp.float32),
        grid_spec=pltpu.PrefetchScalarGridSpec(
            num_scalar_prefetch=0,
            grid=(n_pad // tile_n,),
            in_specs=[
                pl.BlockSpec((M, K), lambda j: (0, 0)),
                pl.BlockSpec((K, tile_n), lambda j: (0, j)),
                pl.BlockSpec((1, tile_n), lambda j: (0, j)),
            ],
            out_specs=pl.BlockSpec((M, tile_n), lambda j: (0, j)),
        ),
        compiler_params=pltpu.CompilerParams(
            dimension_semantics=("parallel",)),   # N tiles are independent
    )(x, w, b)

    return out[:, :N] if n_pad != N else out


# ---------------------------------------------------------------------------
# LSTM recurrence kernel: grid over TIME CHUNKS, unrolled inner loop over the
# steps of a chunk.  h/c live in VMEM scratch across the whole sequence.
# PyTorch gate order: i, f, g, o.  gx_ref already contains x@Wih^T + b_ih+b_hh.
# ---------------------------------------------------------------------------
def _lstm_chunk_kernel(gx_ref, whh_ref, h0_ref, c0_ref,
                       y_ref, hN_ref, cN_ref, h_sc, c_sc,
                       *, hid, chunk, seq_len, has_tail):
    ci = pl.program_id(0)

    @pl.when(ci == 0)
    def _():
        h_sc[...] = h0_ref[...]
        c_sc[...] = c0_ref[...]

    def step(t, carry):
        h = h_sc[...]                                   # (B, H) f32
        c = c_sc[...]                                   # (B, H) f32
        # Only the recurrent matmul remains inside the recurrence.
        gates = (jnp.dot(h.astype(jnp.bfloat16), whh_ref[...],
                         preferred_element_type=jnp.float32)
                 + gx_ref[t])                           # (B, 4H) f32

        i_g = jax.nn.sigmoid(gates[:, 0 * hid:1 * hid])
        f_g = jax.nn.sigmoid(gates[:, 1 * hid:2 * hid])
        g_g = jnp.tanh(gates[:, 2 * hid:3 * hid])
        o_g = jax.nn.sigmoid(gates[:, 3 * hid:4 * hid])

        c_new = f_g * c + i_g * g_g
        h_new = o_g * jnp.tanh(c_new)

        if has_tail:  # static flag: only emitted when S was padded to chunks
            valid = (ci * chunk + t) < seq_len
            h_new = jnp.where(valid, h_new, h)
            c_new = jnp.where(valid, c_new, c)

        h_sc[...] = h_new
        c_sc[...] = c_new
        y_ref[t] = h_new
        return carry

    lax.fori_loop(0, chunk, step, 0, unroll=True)

    @pl.when(ci == pl.num_programs(0) - 1)
    def _():
        hN_ref[...] = h_sc[...]
        cN_ref[...] = c_sc[...]


def lstm_layer(gates_x, whh_bf16, h0, c0, *, chunk=16):
    """gates_x: (S, B, 4H) f32 (precomputed x@Wih^T + combined bias),
    whh_bf16: (H, 4H) bf16, h0/c0: (B, H) f32.
    Returns (y (S, B, H) f32, hN (B, H), cN (B, H))."""
    S, B, G = gates_x.shape
    H = h0.shape[-1]
    assert G == 4 * H

    T = min(S, chunk)
    n_chunks = pl.cdiv(S, T)
    s_pad = n_chunks * T
    has_tail = s_pad != S
    if has_tail:
        gates_x = jnp.pad(gates_x, ((0, s_pad - S), (0, 0), (0, 0)))

    kernel = functools.partial(_lstm_chunk_kernel, hid=H, chunk=T,
                               seq_len=S, has_tail=has_tail)

    out_shapes = (jax.ShapeDtypeStruct((s_pad, B, H), jnp.float32),
                  jax.ShapeDtypeStruct((B, H), jnp.float32),
                  jax.ShapeDtypeStruct((B, H), jnp.float32))

    y, hN, cN = pl.pallas_call(
        kernel,
        out_shape=out_shapes,
        grid_spec=pltpu.PrefetchScalarGridSpec(
            num_scalar_prefetch=0,
            grid=(n_chunks,),
            in_specs=[
                pl.BlockSpec((T, B, 4 * H), lambda ci: (ci, 0, 0)),
                pl.BlockSpec((H, 4 * H), lambda ci: (0, 0)),
                pl.BlockSpec((B, H), lambda ci: (0, 0)),
                pl.BlockSpec((B, H), lambda ci: (0, 0)),
            ],
            out_specs=(
                pl.BlockSpec((T, B, H), lambda ci: (ci, 0, 0)),
                pl.BlockSpec((B, H), lambda ci: (0, 0)),
                pl.BlockSpec((B, H), lambda ci: (0, 0)),
            ),
            scratch_shapes=[pltpu.VMEM((B, H), jnp.float32),
                            pltpu.VMEM((B, H), jnp.float32)],
        ),
        compiler_params=pltpu.CompilerParams(
            dimension_semantics=("arbitrary",)),  # time recurrence is sequential
    )(gates_x, whh_bf16, h0, c0)

    if has_tail:
        y = y[:S]
    return y, hN, cN


# ---------------------------------------------------------------------------
# Model: parameters + forward
# ---------------------------------------------------------------------------
def init_params(key, ntoken, ninp, nhid, nlayers, qu_steps):
    initrange = 0.1
    ninp_rnn = ninp + 2 * qu_steps
    keys = jax.random.split(key, 4 + 4 * nlayers)
    ki = iter(keys)

    def uni(k, shape, scale):
        return jax.random.uniform(k, shape, jnp.float32, -scale, scale)

    params = {
        "enc_w": uni(next(ki), (ntoken, ninp), initrange),
        "enc_dursw": uni(next(ki), (qu_steps, qu_steps), initrange),
        "enc_dursp": uni(next(ki), (qu_steps, qu_steps), initrange),
        "dec_w_t": uni(next(ki), (ntoken, nhid), initrange).T,   # (H, ntoken)
        "dec_b": jnp.zeros((1, ntoken), jnp.float32),
        "lstm": [],
    }
    stdv = 1.0 / (nhid ** 0.5)       # PyTorch default LSTM init
    for layer in range(nlayers):
        din = ninp_rnn if layer == 0 else nhid
        wih = uni(next(ki), (4 * nhid, din), stdv)
        whh = uni(next(ki), (4 * nhid, nhid), stdv)
        b_ih = uni(next(ki), (4 * nhid,), stdv)
        b_hh = uni(next(ki), (4 * nhid,), stdv)
        params["lstm"].append({
            "wih_t": wih.T,                               # (din, 4H)
            "whh_t": whh.T,                               # (H, 4H)
            "bias": (b_ih + b_hh).reshape(1, 4 * nhid),   # combined bias
        })
    return params


def init_hidden(nlayers, bsz, nhid):
    z = jnp.zeros((nlayers, bsz, nhid), jnp.float32)
    return (z, z)


@jax.jit
def tedlium_forward(params, word_ids, dur_ids, hidden):
    """word_ids: (S, B) int32; dur_ids: (S, B, 2) int32;
    hidden: (h0, c0) each (nlayers, B, H).
    Returns (decoded (S, B, ntoken), (hN, cN))."""
    # Embedding lookups + concat (glue, plain JAX).  Dropout = identity (eval).
    emb_word = params["enc_w"][word_ids]                 # (S, B, ninp)
    emb_durw = params["enc_dursw"][dur_ids[:, :, 0]]     # (S, B, Q)
    emb_durp = params["enc_dursp"][dur_ids[:, :, 1]]     # (S, B, Q)
    emb = jnp.concatenate([emb_word, emb_durw, emb_durp], axis=2)

    h0, c0 = hidden
    S, B, _ = emb.shape
    x = emb
    h_finals, c_finals = [], []
    for layer, lp in enumerate(params["lstm"]):
        din = x.shape[-1]
        # Hoisted input projection: one big (S*B, Din) x (Din, 4H) bf16 matmul
        # with the combined bias folded in.
        gx = matmul_bias(x.reshape(S * B, din).astype(jnp.bfloat16),
                         lp["wih_t"].astype(jnp.bfloat16),
                         lp["bias"])                      # (S*B, 4H) f32
        gx = gx.reshape(S, B, -1)
        y, hN, cN = lstm_layer(gx, lp["whh_t"].astype(jnp.bfloat16),
                               h0[layer], c0[layer])
        x = y                                             # inter-layer dropout = identity
        h_finals.append(hN)
        c_finals.append(cN)

    H = x.shape[-1]
    flat = x.reshape(S * B, H).astype(jnp.bfloat16)
    decoded = matmul_bias(flat, params["dec_w_t"].astype(jnp.bfloat16),
                          params["dec_b"])                # N padded to 128 inside
    decoded = decoded.reshape(S, B, -1)
    return decoded, (jnp.stack(h_finals), jnp.stack(c_finals))


if __name__ == "__main__":
    # Small shapes consistent with the module's forward.
    ntoken, ninp, nhid, nlayers, qu_steps = 50, 16, 32, 2, 20
    S, B = 8, 4

    key = jax.random.PRNGKey(0)
    kp, kw, kd = jax.random.split(key, 3)

    params = init_params(kp, ntoken, ninp, nhid, nlayers, qu_steps)
    word_ids = jax.random.randint(kw, (S, B), 0, ntoken, dtype=jnp.int32)
    dur_ids = jax.random.randint(kd, (S, B, 2), 0, qu_steps, dtype=jnp.int32)
    hidden = init_hidden(nlayers, B, nhid)

    decoded, (hN, cN) = tedlium_forward(params, word_ids, dur_ids, hidden)
    jax.block_until_ready((decoded, hN, cN))

    assert decoded.shape == (S, B, ntoken)
    assert hN.shape == (nlayers, B, nhid) and cN.shape == (nlayers, B, nhid)
    print("KERNEL_OK")
</pallas_src>

<mosaic_0001>
module attributes {stable_mosaic.version = 11 : i64} {
  func.func @_matmul_bias_kernel(%arg0: i32, %arg1: memref<32x56xbf16, #tpu.memory_space<vmem>>, %arg2: memref<56x128xbf16, #tpu.memory_space<vmem>>, %arg3: memref<1x128xf32, #tpu.memory_space<vmem>>, %arg4: memref<32x128xf32, #tpu.memory_space<vmem>>) attributes {dimension_semantics = [#tpu.dimension_semantics<parallel>], iteration_bounds = array<i64: 1>, scalar_prefetch = 0 : i64, scratch_operands = 0 : i64, tpu.core_type = #tpu.core_type<tc>, window_params = [{pipeline_mode = #tpu.pipeline_mode<synchronous>, transform_indices = @transform_0, window_bounds = array<i64: 32, 56>}, {transform_indices = @transform_1, window_bounds = array<i64: 56, 128>}, {transform_indices = @transform_2, window_bounds = array<i64: 1, 128>}, {transform_indices = @transform_3, window_bounds = array<i64: 32, 128>}]} {
    %c0 = arith.constant 0 : index
    %c0_0 = arith.constant 0 : index
    %0 = vector.load %arg1[%c0, %c0_0] : memref<32x56xbf16, #tpu.memory_space<vmem>>, vector<32x56xbf16>
    %c0_1 = arith.constant 0 : index
    %c0_2 = arith.constant 0 : index
    %1 = vector.load %arg2[%c0_1, %c0_2] : memref<56x128xbf16, #tpu.memory_space<vmem>>, vector<56x128xbf16>
    %cst = arith.constant dense<0.000000e+00> : vector<32x128xf32>
    %2 = tpu.matmul %0, %1, %cst {dimension_numbers = #tpu.dot_dimension_numbers<[1], [0], [0], [1], [0, 0, 1, 1], [], []>} : vector<32x56xbf16>, vector<56x128xbf16>, vector<32x128xf32> -> vector<32x128xf32>
    %c0_3 = arith.constant 0 : index
    %c0_4 = arith.constant 0 : index
    %3 = vector.load %arg3[%c0_3, %c0_4] : memref<1x128xf32, #tpu.memory_space<vmem>>, vector<1x128xf32>
    %4 = vector.broadcast %3 : vector<1x128xf32> to vector<32x128xf32>
    %5 = arith.addf %2, %4 : vector<32x128xf32>
    %c0_5 = arith.constant 0 : index
    %c0_6 = arith.constant 0 : index
    %6 = vector.load %arg4[%c0_5, %c0_6] : memref<32x128xf32, #tpu.memory_space<vmem>>, vector<32x128xf32>
    tpu.vector_store %arg4[%c0_5, %c0_6], %5 {strides = array<i32>} : memref<32x128xf32, #tpu.memory_space<vmem>>, vector<32x128xf32>,
    return
  }
  func.func @transform_0(%arg0: i32) -> (i32, i32) {
    %c0_i32 = arith.constant 0 : i32
    %c0_i32_0 = arith.constant 0 : i32
    %c0_i32_1 = arith.constant 0 : i32
    return %c0_i32, %c0_i32_0 : i32, i32
  }
  func.func @transform_1(%arg0: i32) -> (i32, i32) {
    %c0_i32 = arith.constant 0 : i32
    %c0_i32_0 = arith.constant 0 : i32
    return %c0_i32, %arg0 : i32, i32
  }
  func.func @transform_2(%arg0: i32) -> (i32, i32) {
    %c0_i32 = arith.constant 0 : i32
    %c0_i32_0 = arith.constant 0 : i32
    return %c0_i32, %arg0 : i32, i32
  }
  func.func @transform_3(%arg0: i32) -> (i32, i32) {
    %c0_i32 = arith.constant 0 : i32
    %c0_i32_0 = arith.constant 0 : i32
    return %c0_i32, %arg0 : i32, i32
  }
}

module attributes {stable_mosaic.version = 11 : i64} {
  func.func @_matmul_bias_kernel(%arg0: i32, %arg1: memref<32x32xbf16, #tpu.memory_space<vmem>>, %arg2: memref<32x128xbf16, #tpu.memory_space<vmem>>, %arg3: memref<1x128xf32, #tpu.memory_space<vmem>>, %arg4: memref<32x128xf32, #tpu.memory_space<vmem>>) attributes {dimension_semantics = [#tpu.dimension_semantics<parallel>], iteration_bounds = array<i64: 1>, scalar_prefetch = 0 : i64, scratch_operands = 0 : i64, tpu.core_type = #tpu.core_type<tc>, window_params = [{pipeline_mode = #tpu.pipeline_mode<synchronous>, transform_indices = @transform_0, window_bounds = array<i64: 32, 32>}, {transform_indices = @transform_1, window_bounds = array<i64: 32, 128>}, {transform_indices = @transform_2, window_bounds = array<i64: 1, 128>}, {transform_indices = @transform_3, window_bounds = array<i64: 32, 128>}]} {
    %c0 = arith.constant 0 : index
    %c0_0 = arith.constant 0 : index
    %0 = vector.load %arg1[%c0, %c0_0] : memref<32x32xbf16, #tpu.memory_space<vmem>>, vector<32x32xbf16>
    %c0_1 = arith.constant 0 : index
    %c0_2 = arith.constant 0 : index
    %1 = vector.load %arg2[%c0_1, %c0_2] : memref<32x128xbf16, #tpu.memory_space<vmem>>, vector<32x128xbf16>
    %cst = arith.constant dense<0.000000e+00> : vector<32x128xf32>
    %2 = tpu.matmul %0, %1, %cst {dimension_numbers = #tpu.dot_dimension_numbers<[1], [0], [0], [1], [0, 0, 1, 1], [], []>} : vector<32x32xbf16>, vector<32x128xbf16>, vector<32x128xf32> -> vector<32x128xf32>
    %c0_3 = arith.constant 0 : index
    %c0_4 = arith.constant 0 : index
    %3 = vector.load %arg3[%c0_3, %c0_4] : memref<1x128xf32, #tpu.memory_space<vmem>>, vector<1x128xf32>
    %4 = vector.broadcast %3 : vector<1x128xf32> to vector<32x128xf32>
    %5 = arith.addf %2, %4 : vector<32x128xf32>
    %c0_5 = arith.constant 0 : index
    %c0_6 = arith.constant 0 : index
    %6 = vector.load %arg4[%c0_5, %c0_6] : memref<32x128xf32, #tpu.memory_space<vmem>>, vector<32x128xf32>
    tpu.vector_store %arg4[%c0_5, %c0_6], %5 {strides = array<i32>} : memref<32x128xf32, #tpu.memory_space<vmem>>, vector<32x128xf32>,
    return
  }
  func.func @transform_0(%arg0: i32) -> (i32, i32) {
    %c0_i32 = arith.constant 0 : i32
    %c0_i32_0 = arith.constant 0 : i32
    %c0_i32_1 = arith.constant 0 : i32
    return %c0_i32, %c0_i32_0 : i32, i32
  }
  func.func @transform_1(%arg0: i32) -> (i32, i32) {
    %c0_i32 = arith.constant 0 : i32
    %c0_i32_0 = arith.constant 0 : i32
    return %c0_i32, %arg0 : i32, i32
  }
  func.func @transform_2(%arg0: i32) -> (i32, i32) {
    %c0_i32 = arith.constant 0 : i32
    %c0_i32_0 = arith.constant 0 : i32
    return %c0_i32, %arg0 : i32, i32
  }
  func.func @transform_3(%arg0: i32) -> (i32, i32) {
    %c0_i32 = arith.constant 0 : i32
    %c0_i32_0 = arith.constant 0 : i32
    return %c0_i32, %arg0 : i32, i32
  }
}

module attributes {stable_mosaic.version = 11 : i64} {
  func.func @_lstm_chunk_kernel(%arg0: i32, %arg1: memref<8x4x128xf32, #tpu.memory_space<vmem>>, %arg2: memref<32x128xbf16, #tpu.memory_space<vmem>>, %arg3: memref<4x32xf32, #tpu.memory_space<vmem>>, %arg4: memref<4x32xf32, #tpu.memory_space<vmem>>, %arg5: memref<8x4x32xf32, #tpu.memory_space<vmem>>, %arg6: memref<4x32xf32, #tpu.memory_space<vmem>>, %arg7: memref<4x32xf32, #tpu.memory_space<vmem>>, %arg8: memref<4x32xf32, #tpu.memory_space<vmem>>, %arg9: memref<4x32xf32, #tpu.memory_space<vmem>>) attributes {dimension_semantics = [#tpu.dimension_semantics<arbitrary>], iteration_bounds = array<i64: 1>, scalar_prefetch = 0 : i64, scratch_operands = 2 : i64, tpu.core_type = #tpu.core_type<tc>, window_params = [{transform_indices = @transform_0, window_bounds = array<i64: 8, 4, 128>}, {pipeline_mode = #tpu.pipeline_mode<synchronous>, transform_indices = @transform_1, window_bounds = array<i64: 32, 128>}, {pipeline_mode = #tpu.pipeline_mode<synchronous>, transform_indices = @transform_2, window_bounds = array<i64: 4, 32>}, {pipeline_mode = #tpu.pipeline_mode<synchronous>, transform_indices = @transform_3, window_bounds = array<i64: 4, 32>}, {transform_indices = @transform_4, window_bounds = array<i64: 8, 4, 32>}, {pipeline_mode = #tpu.pipeline_mode<synchronous>, transform_indices = @transform_5, window_bounds = array<i64: 4, 32>}, {pipeline_mode = #tpu.pipeline_mode<synchronous>, transform_indices = @transform_6, window_bounds = array<i64: 4, 32>}]} {
    %c0_i32 = arith.constant 0 : i32
    %0 = arith.cmpi eq, %arg0, %c0_i32 : i32
    %1 = arith.extui %0 : i1 to i32
    %c0_i32_0 = arith.constant 0 : i32
    %2 = arith.cmpi ne, %1, %c0_i32_0 : i32
    scf.if %2 {
      %c0_146 = arith.constant 0 : index
      %c0_147 = arith.constant 0 : index
      %326 = vector.load %arg3[%c0_146, %c0_147] : memref<4x32xf32, #tpu.memory_space<vmem>>, vector<4x32xf32>
      %c0_148 = arith.constant 0 : index
      %c0_149 = arith.constant 0 : index
      %327 = vector.load %arg8[%c0_148, %c0_149] : memref<4x32xf32, #tpu.memory_space<vmem>>, vector<4x32xf32>
      tpu.vector_store %arg8[%c0_148, %c0_149], %326 {strides = array<i32>} : memref<4x32xf32, #tpu.memory_space<vmem>>, vector<4x32xf32>,
      %c0_150 = arith.constant 0 : index
      %c0_151 = arith.constant 0 : index
      %328 = vector.load %arg4[%c0_150, %c0_151] : memref<4x32xf32, #tpu.memory_space<vmem>>, vector<4x32xf32>
      %c0_152 = arith.constant 0 : index
      %c0_153 = arith.constant 0 : index
      %329 = vector.load %arg9[%c0_152, %c0_153] : memref<4x32xf32, #tpu.memory_space<vmem>>, vector<4x32xf32>
      tpu.vector_store %arg9[%c0_152, %c0_153], %328 {strides = array<i32>} : memref<4x32xf32, #tpu.memory_space<vmem>>, vector<4x32xf32>,
    } else {
    }
    %c0_i32_1 = arith.constant 0 : i32
    %c0 = arith.constant 0 : index
    %c0_2 = arith.constant 0 : index
    %3 = vector.load %arg8[%c0, %c0_2] : memref<4x32xf32, #tpu.memory_space<vmem>>, vector<4x32xf32>
    %c0_3 = arith.constant 0 : index
    %c0_4 = arith.constant 0 : index
    %4 = vector.load %arg9[%c0_3, %c0_4] : memref<4x32xf32, #tpu.memory_space<vmem>>, vector<4x32xf32>
    %5 = arith.truncf %3 : vector<4x32xf32> to vector<4x32xbf16>
    %c0_5 = arith.constant 0 : index
    %c0_6 = arith.constant 0 : index
    %6 = vector.load %arg2[%c0_5, %c0_6] : memref<32x128xbf16, #tpu.memory_space<vmem>>, vector<32x128xbf16>
    %cst = arith.constant dense<0.000000e+00> : vector<4x128xf32>
    %7 = tpu.matmul %5, %6, %cst {dimension_numbers = #tpu.dot_dimension_numbers<[1], [0], [0], [1], [0, 0, 1, 1], [], []>} : vector<4x32xbf16>, vector<32x128xbf16>, vector<4x128xf32> -> vector<4x128xf32>
    %8 = arith.index_cast %c0_i32_1 : i32 to index
    %c0_7 = arith.constant 0 : index
    %c0_8 = arith.constant 0 : index
    %9 = vector.load %arg1[%8, %c0_7, %c0_8] : memref<8x4x128xf32, #tpu.memory_space<vmem>>, vector<1x4x128xf32>
    %10 = vector.shape_cast %9 : vector<1x4x128xf32> to vector<4x128xf32>
    %11 = arith.addf %7, %10 : vector<4x128xf32>
    %12 = vector.extract_strided_slice %11 {offsets = [0, 0], sizes = [4, 32], strides = [1, 1]} : vector<4x128xf32> to vector<4x32xf32>
    %13 = arith.negf %12 : vector<4x32xf32>
    %14 = math.exp %13 : vector<4x32xf32>
    %cst_9 = arith.constant 1.000000e+00 : f32
    %15 = vector.broadcast %cst_9 : f32 to vector<4x32xf32>
    %16 = arith.addf %15, %14 : vector<4x32xf32>
    %17 = arith.divf %15, %16 : vector<4x32xf32>
    %18 = vector.extract_strided_slice %11 {offsets = [0, 32], sizes = [4, 32], strides = [1, 1]} : vector<4x128xf32> to vector<4x32xf32>
    %19 = arith.negf %18 : vector<4x32xf32>
    %20 = math.exp %19 : vector<4x32xf32>
    %cst_10 = arith.constant 1.000000e+00 : f32
    %21 = vector.broadcast %cst_10 : f32 to vector<4x32xf32>
    %22 = arith.addf %21, %20 : vector<4x32xf32>
    %23 = arith.divf %21, %22 : vector<4x32xf32>
    %24 = vector.extract_strided_slice %11 {offsets = [0, 64], sizes = [4, 32], strides = [1, 1]} : vector<4x128xf32> to vector<4x32xf32>
    %25 = math.tanh %24 : vector<4x32xf32>
    %26 = vector.extract_strided_slice %11 {offsets = [0, 96], sizes = [4, 32], strides = [1, 1]} : vector<4x128xf32> to vector<4x32xf32>
    %27 = arith.negf %26 : vector<4x32xf32>
    %28 = math.exp %27 : vector<4x32xf32>
    %cst_11 = arith.constant 1.000000e+00 : f32
    %29 = vector.broadcast %cst_11 : f32 to vector<4x32xf32>
    %30 = arith.addf %29, %28 : vector<4x32xf32>
    %31 = arith.divf %29, %30 : vector<4x32xf32>
    %32 = arith.mulf %23, %4 : vector<4x32xf32>
    %33 = arith.mulf %17, %25 : vector<4x32xf32>
    %34 = arith.addf %32, %33 : vector<4x32xf32>
    %35 = math.tanh %34 : vector<4x32xf32>
    %36 = arith.mulf %31, %35 : vector<4x32xf32>
    %c0_12 = arith.constant 0 : index
    %c0_13 = arith.constant 0 : index
    %37 = vector.load %arg8[%c0_12, %c0_13] : memref<4x32xf32, #tpu.memory_space<vmem>>, vector<4x32xf32>
    tpu.vector_store %arg8[%c0_12, %c0_13], %36 {strides = array<i32>} : memref<4x32xf32, #tpu.memory_space<vmem>>, vector<4x32xf32>,
    %c0_14 = arith.constant 0 : index
    %c0_15 = arith.constant 0 : index
    %38 = vector.load %arg9[%c0_14, %c0_15] : memref<4x32xf32, #tpu.memory_space<vmem>>, vector<4x32xf32>
    tpu.vector_store %arg9[%c0_14, %c0_15], %34 {strides = array<i32>} : memref<4x32xf32, #tpu.memory_space<vmem>>, vector<4x32xf32>,
    %39 = arith.index_cast %c0_i32_1 : i32 to index
    %c0_16 = arith.constant 0 : index
    %c0_17 = arith.constant 0 : index
    %40 = vector.load %arg5[%39, %c0_16, %c0_17] : memref<8x4x32xf32, #tpu.memory_space<vmem>>, vector<1x4x32xf32>
    %41 = vector.shape_cast %40 : vector<1x4x32xf32> to vector<4x32xf32>
    %42 = vector.shape_cast %36 : vector<4x32xf32> to vector<1x4x32xf32>
    tpu.vector_store %arg5[%39, %c0_16, %c0_17], %42 {strides = array<i32>} : memref<8x4x32xf32, #tpu.memory_space<vmem>>, vector<1x4x32xf32>,
    %c1_i32 = arith.constant 1 : i32
    %c0_18 = arith.constant 0 : index
    %c0_19 = arith.constant 0 : index
    %43 = vector.load %arg8[%c0_18, %c0_19] : memref<4x32xf32, #tpu.memory_space<vmem>>, vector<4x32xf32>
    %c0_20 = arith.constant 0 : index
    %c0_21 = arith.constant 0 : index
    %44 = vector.load %arg9[%c0_20, %c0_21] : memref<4x32xf32, #tpu.memory_space<vmem>>, vector<4x32xf32>
    %45 = arith.truncf %43 : vector<4x32xf32> to vector<4x32xbf16>
    %c0_22 = arith.constant 0 : index
    %c0_23 = arith.constant 0 : index
    %46 = vector.load %arg2[%c0_22, %c0_23] : memref<32x128xbf16, #tpu.memory_space<vmem>>, vector<32x128xbf16>
    %cst_24 = arith.constant dense<0.000000e+00> : vector<4x128xf32>
    %47 = tpu.matmul %45, %46, %cst_24 {dimension_numbers = #tpu.dot_dimension_numbers<[1], [0], [0], [1], [0, 0, 1, 1], [], []>} : vector<4x32xbf16>, vector<32x128xbf16>, vector<4x128xf32> -> vector<4x128xf32>
    %48 = arith.index_cast %c1_i32 : i32 to index
    %c0_25 = arith.constant 0 : index
    %c0_26 = arith.constant 0 : index
    %49 = vector.load %arg1[%48, %c0_25, %c0_26] : memref<8x4x128xf32, #tpu.memory_space<vmem>>, vector<1x4x128xf32>
    %50 = vector.shape_cast %49 : vector<1x4x128xf32> to vector<4x128xf32>
    %51 = arith.addf %47, %50 : vector<4x128xf32>
    %52 = vector.extract_strided_slice %51 {offsets = [0, 0], sizes = [4, 32], strides = [1, 1]} : vector<4x128xf32> to vector<4x32xf32>
    %53 = arith.negf %52 : vector<4x32xf32>
    %54 = math.exp %53 : vector<4x32xf32>
    %cst_27 = arith.constant 1.000000e+00 : f32
    %55 = vector.broadcast %cst_27 : f32 to vector<4x32xf32>
    %56 = arith.addf %55, %54 : vector<4x32xf32>
    %57 = arith.divf %55, %56 : vector<4x32xf32>
    %58 = vector.extract_strided_slice %51 {offsets = [0, 32], sizes = [4, 32], strides = [1, 1]} : vector<4x128xf32> to vector<4x32xf32>
    %59 = arith.negf %58 : vector<4x32xf32>
    %60 = math.exp %59 : vector<4x32xf32>
    %cst_28 = arith.constant 1.000000e+00 : f32
    %61 = vector.broadcast %cst_28 : f32 to vector<4x32xf32>
    %62 = arith.addf %61, %60 : vector<4x32xf32>
    %63 = arith.divf %61, %62 : vector<4x32xf32>
    %64 = vector.extract_strided_slice %51 {offsets = [0, 64], sizes = [4, 32], strides = [1, 1]} : vector<4x128xf32> to vector<4x32xf32>
    %65 = math.tanh %64 : vector<4x32xf32>
    %66 = vector.extract_strided_slice %51 {offsets = [0, 96], sizes = [4, 32], strides = [1, 1]} : vector<4x128xf32> to vector<4x32xf32>
    %67 = arith.negf %66 : vector<4x32xf32>
    %68 = math.exp %67 : vector<4x32xf32>
    %cst_29 = arith.constant 1.000000e+00 : f32
    %69 = vector.broadcast %cst_29 : f32 to vector<4x32xf32>
    %70 = arith.addf %69, %68 : vector<4x32xf32>
    %71 = arith.divf %69, %70 : vector<4x32xf32>
    %72 = arith.mulf %63, %44 : vector<4x32xf32>
    %73 = arith.mulf %57, %65 : vector<4x32xf32>
    %74 = arith.addf %72, %73 : vector<4x32xf32>
    %75 = math.tanh %74 : vector<4x32xf32>
    %76 = arith.mulf %71, %75 : vector<4x32xf32>
    %c0_30 = arith.constant 0 : index
    %c0_31 = arith.constant 0 : index
    %77 = vector.load %arg8[%c0_30, %c0_31] : memref<4x32xf32, #tpu.memory_space<vmem>>, vector<4x32xf32>
    tpu.vector_store %arg8[%c0_30, %c0_31], %76 {strides = array<i32>} : memref<4x32xf32, #tpu.memory_space<vmem>>, vector<4x32xf32>,
    %c0_32 = arith.constant 0 : index
    %c0_33 = arith.constant 0 : index
    %78 = vector.load %arg9[%c0_32, %c0_33] : memref<4x32xf32, #tpu.memory_space<vmem>>, vector<4x32xf32>
    tpu.vector_store %arg9[%c0_32, %c0_33], %74 {strides = array<i32>} : memref<4x32xf32, #tpu.memory_space<vmem>>, vector<4x32xf32>,
    %79 = arith.index_cast %c1_i32 : i32 to index
    %c0_34 = arith.constant 0 : index
    %c0_35 = arith.constant 0 : index
    %80 = vector.load %arg5[%79, %c0_34, %c0_35] : memref<8x4x32xf32, #tpu.memory_space<vmem>>, vector<1x4x32xf32>
    %81 = vector.shape_cast %80 : vector<1x4x32xf32> to vector<4x32xf32>
    %82 = vector.shape_cast %76 : vector<4x32xf32> to vector<1x4x32xf32>
    tpu.vector_store %arg5[%79, %c0_34, %c0_35], %82 {strides = array<i32>} : memref<8x4x32xf32, #tpu.memory_space<vmem>>, vector<1x4x32xf32>,
    %c2_i32 = arith.constant 2 : i32
    %c0_36 = arith.constant 0 : index
    %c0_37 = arith.constant 0 : index
    %83 = vector.load %arg8[%c0_36, %c0_37] : memref<4x32xf32, #tpu.memory_space<vmem>>, vector<4x32xf32>
    %c0_38 = arith.constant 0 : index
    %c0_39 = arith.constant 0 : index
    %84 = vector.load %arg9[%c0_38, %c0_39] : memref<4x32xf32, #tpu.memory_space<vmem>>, vector<4x32xf32>
    %85 = arith.truncf %83 : vector<4x32xf32> to vector<4x32xbf16>
    %c0_40 = arith.constant 0 : index
    %c0_41 = arith.constant 0 : index
    %86 = vector.load %arg2[%c0_40, %c0_41] : memref<32x128xbf16, #tpu.memory_space<vmem>>, vector<32x128xbf16>
    %cst_42 = arith.constant dense<0.000000e+00> : vector<4x128xf32>
    %87 = tpu.matmul %85, %86, %cst_42 {dimension_numbers = #tpu.dot_dimension_numbers<[1], [0], [0], [1], [0, 0, 1, 1], [], []>} : vector<4x32xbf16>, vector<32x128xbf16>, vector<4x128xf32> -> vector<4x128xf32>
    %88 = arith.index_cast %c2_i32 : i32 to index
    %c0_43 = arith.constant 0 : index
    %c0_44 = arith.constant 0 : index
    %89 = vector.load %arg1[%88, %c0_43, %c0_44] : memref<8x4x128xf32, #tpu.memory_space<vmem>>, vector<1x4x128xf32>
    %90 = vector.shape_cast %89 : vector<1x4x128xf32> to vector<4x128xf32>
    %91 = arith.addf %87, %90 : vector<4x128xf32>
    %92 = vector.extract_strided_slice %91 {offsets = [0, 0], sizes = [4, 32], strides = [1, 1]} : vector<4x128xf32> to vector<4x32xf32>
    %93 = arith.negf %92 : vector<4x32xf32>
    %94 = math.exp %93 : vector<4x32xf32>
    %cst_45 = arith.constant 1.000000e+00 : f32
    %95 = vector.broadcast %cst_45 : f32 to vector<4x32xf32>
    %96 = arith.addf %95, %94 : vector<4x32xf32>
    %97 = arith.divf %95, %96 : vector<4x32xf32>
    %98 = vector.extract_strided_slice %91 {offsets = [0, 32], sizes = [4, 32], strides = [1, 1]} : vector<4x128xf32> to vector<4x32xf32>
    %99 = arith.negf %98 : vector<4x32xf32>
    %100 = math.exp %99 : vector<4x32xf32>
    %cst_46 = arith.constant 1.000000e+00 : f32
    %101 = vector.broadcast %cst_46 : f32 to vector<4x32xf32>
    %102 = arith.addf %101, %100 : vector<4x32xf32>
    %103 = arith.divf %101, %102 : vector<4x32xf32>
    %104 = vector.extract_strided_slice %91 {offsets = [0, 64], sizes = [4, 32], strides = [1, 1]} : vector<4x128xf32> to vector<4x32xf32>
    %105 = math.tanh %104 : vector<4x32xf32>
    %106 = vector.extract_strided_slice %91 {offsets = [0, 96], sizes = [4, 32], strides = [1, 1]} : vector<4x128xf32> to vector<4x32xf32>
    %107 = arith.negf %106 : vector<4x32xf32>
    %108 = math.exp %107 : vector<4x32xf32>
    %cst_47 = arith.constant 1.000000e+00 : f32
    %109 = vector.broadcast %cst_47 : f32 to vector<4x32xf32>
    %110 = arith.addf %109, %108 : vector<4x32xf32>
    %111 = arith.divf %109, %110 : vector<4x32xf32>
    %112 = arith.mulf %103, %84 : vector<4x32xf32>
    %113 = arith.mulf %97, %105 : vector<4x32xf32>
    %114 = arith.addf %112, %113 : vector<4x32xf32>
    %115 = math.tanh %114 : vector<4x32xf32>
    %116 = arith.mulf %111, %115 : vector<4x32xf32>
    %c0_48 = arith.constant 0 : index
    %c0_49 = arith.constant 0 : index
    %117 = vector.load %arg8[%c0_48, %c0_49] : memref<4x32xf32, #tpu.memory_space<vmem>>, vector<4x32xf32>
    tpu.vector_store %arg8[%c0_48, %c0_49], %116 {strides = array<i32>} : memref<4x32xf32, #tpu.memory_space<vmem>>, vector<4x32xf32>,
    %c0_50 = arith.constant 0 : index
    %c0_51 = arith.constant 0 : index
    %118 = vector.load %arg9[%c0_50, %c0_51] : memref<4x32xf32, #tpu.memory_space<vmem>>, vector<4x32xf32>
    tpu.vector_store %arg9[%c0_50, %c0_51], %114 {strides = array<i32>} : memref<4x32xf32, #tpu.memory_space<vmem>>, vector<4x32xf32>,
    %119 = arith.index_cast %c2_i32 : i32 to index
    %c0_52 = arith.constant 0 : index
    %c0_53 = arith.constant 0 : index
    %120 = vector.load %arg5[%119, %c0_52, %c0_53] : memref<8x4x32xf32, #tpu.memory_space<vmem>>, vector<1x4x32xf32>
    %121 = vector.shape_cast %120 : vector<1x4x32xf32> to vector<4x32xf32>
    %122 = vector.shape_cast %116 : vector<4x32xf32> to vector<1x4x32xf32>
    tpu.vector_store %arg5[%119, %c0_52, %c0_53], %122 {strides = array<i32>} : memref<8x4x32xf32, #tpu.memory_space<vmem>>, vector<1x4x32xf32>,
    %c3_i32 = arith.constant 3 : i32
    %c0_54 = arith.constant 0 : index
    %c0_55 = arith.constant 0 : index
    %123 = vector.load %arg8[%c0_54, %c0_55] : memref<4x32xf32, #tpu.memory_space<vmem>>, vector<4x32xf32>
    %c0_56 = arith.constant 0 : index
    %c0_57 = arith.constant 0 : index
    %124 = vector.load %arg9[%c0_56, %c0_57] : memref<4x32xf32, #tpu.memory_space<vmem>>, vector<4x32xf32>
    %125 = arith.truncf %123 : vector<4x32xf32> to vector<4x32xbf16>
    %c0_58 = arith.constant 0 : index
    %c0_59 = arith.constant 0 : index
    %126 = vector.load %arg2[%c0_58, %c0_59] : memref<32x128xbf16, #tpu.memory_space<vmem>>, vector<32x128xbf16>
    %cst_60 = arith.constant dense<0.000000e+00> : vector<4x128xf32>
    %127 = tpu.matmul %125, %126, %cst_60 {dimension_numbers = #tpu.dot_dimension_numbers<[1], [0], [0], [1], [0, 0, 1, 1], [], []>} : vector<4x32xbf16>, vector<32x128xbf16>, vector<4x128xf32> -> vector<4x128xf32>
    %128 = arith.index_cast %c3_i32 : i32 to index
    %c0_61 = arith.constant 0 : index
    %c0_62 = arith.constant 0 : index
    %129 = vector.load %arg1[%128, %c0_61, %c0_62] : memref<8x4x128xf32, #tpu.memory_space<vmem>>, vector<1x4x128xf32>
    %130 = vector.shape_cast %129 : vector<1x4x128xf32> to vector<4x128xf32>
    %131 = arith.addf %127, %130 : vector<4x128xf32>
    %132 = vector.extract_strided_slice %131 {offsets = [0, 0], sizes = [4, 32], strides = [1, 1]} : vector<4x128xf32> to vector<4x32xf32>
    %133 = arith.negf %132 : vector<4x32xf32>
    %134 = math.exp %133 : vector<4x32xf32>
    %cst_63 = arith.constant 1.000000e+00 : f32
    %135 = vector.broadcast %cst_63 : f32 to vector<4x32xf32>
    %136 = arith.addf %135, %134 : vector<4x32xf32>
    %137 = arith.divf %135, %136 : vector<4x32xf32>
    %138 = vector.extract_strided_slice %131 {offsets = [0, 32], sizes = [4, 32], strides = [1, 1]} : vector<4x128xf32> to vector<4x32xf32>
    %139 = arith.negf %138 : vector<4x32xf32>
    %140 = math.exp %139 : vector<4x32xf32>
    %cst_64 = arith.constant 1.000000e+00 : f32
    %141 = vector.broadcast %cst_64 : f32 to vector<4x32xf32>
    %142 = arith.addf %141, %140 : vector<4x32xf32>
    %143 = arith.divf %141, %142 : vector<4x32xf32>
    %144 = vector.extract_strided_slice %131 {offsets = [0, 64], sizes = [4, 32], strides = [1, 1]} : vector<4x128xf32> to vector<4x32xf32>
    %145 = math.tanh %144 : vector<4x32xf32>
    %146 = vector.extract_strided_slice %131 {offsets = [0, 96], sizes = [4, 32], strides = [1, 1]} : vector<4x128xf32> to vector<4x32xf32>
    %147 = arith.negf %146 : vector<4x32xf32>
    %148 = math.exp %147 : vector<4x32xf32>
    %cst_65 = arith.constant 1.000000e+00 : f32
    %149 = vector.broadcast %cst_65 : f32 to vector<4x32xf32>
    %150 = arith.addf %149, %148 : vector<4x32xf32>
    %151 = arith.divf %149, %150 : vector<4x32xf32>
    %152 = arith.mulf %143, %124 : vector<4x32xf32>
    %153 = arith.mulf %137, %145 : vector<4x32xf32>
    %154 = arith.addf %152, %153 : vector<4x32xf32>
    %155 = math.tanh %154 : vector<4x32xf32>
    %156 = arith.mulf %151, %155 : vector<4x32xf32>
    %c0_66 = arith.constant 0 : index
    %c0_67 = arith.constant 0 : index
    %157 = vector.load %arg8[%c0_66, %c0_67] : memref<4x32xf32, #tpu.memory_space<vmem>>, vector<4x32xf32>
    tpu.vector_store %arg8[%c0_66, %c0_67], %156 {strides = array<i32>} : memref<4x32xf32, #tpu.memory_space<vmem>>, vector<4x32xf32>,
    %c0_68 = arith.constant 0 : index
    %c0_69 = arith.constant 0 : index
    %158 = vector.load %arg9[%c0_68, %c0_69] : memref<4x32xf32, #tpu.memory_space<vmem>>, vector<4x32xf32>
    tpu.vector_store %arg9[%c0_68, %c0_69], %154 {strides = array<i32>} : memref<4x32xf32, #tpu.memory_space<vmem>>, vector<4x32xf32>,
    %159 = arith.index_cast %c3_i32 : i32 to index
    %c0_70 = arith.constant 0 : index
    %c0_71 = arith.constant 0 : index
    %160 = vector.load %arg5[%159, %c0_70, %c0_71] : memref<8x4x32xf32, #tpu.memory_space<vmem>>, vector<1x4x32xf32>
    %161 = vector.shape_cast %160 : vector<1x4x32xf32> to vector<4x32xf32>
    %162 = vector.shape_cast %156 : vector<4x32xf32> to vector<1x4x32xf32>
    tpu.vector_store %arg5[%159, %c0_70, %c0_71], %162 {strides = array<i32>} : memref<8x4x32xf32, #tpu.memory_space<vmem>>, vector<1x4x32xf32>,
    %c4_i32 = arith.constant 4 : i32
    %c0_72 = arith.constant 0 : index
    %c0_73 = arith.constant 0 : index
    %163 = vector.load %arg8[%c0_72, %c0_73] : memref<4x32xf32, #tpu.memory_space<vmem>>, vector<4x32xf32>
    %c0_74 = arith.constant 0 : index
    %c0_75 = arith.constant 0 : index
    %164 = vector.load %arg9[%c0_74, %c0_75] : memref<4x32xf32, #tpu.memory_space<vmem>>, vector<4x32xf32>
    %165 = arith.truncf %163 : vector<4x32xf32> to vector<4x32xbf16>
    %c0_76 = arith.constant 0 : index
    %c0_77 = arith.constant 0 : index
    %166 = vector.load %arg2[%c0_76, %c0_77] : memref<32x128xbf16, #tpu.memory_space<vmem>>, vector<32x128xbf16>
    %cst_78 = arith.constant dense<0.000000e+00> : vector<4x128xf32>
    %167 = tpu.matmul %165, %166, %cst_78 {dimension_numbers = #tpu.dot_dimension_numbers<[1], [0], [0], [1], [0, 0, 1, 1], [], []>} : vector<4x32xbf16>, vector<32x128xbf16>, vector<4x128xf32> -> vector<4x128xf32>
    %168 = arith.index_cast %c4_i32 : i32 to index
    %c0_79 = arith.constant 0 : index
    %c0_80 = arith.constant 0 : index
    %169 = vector.load %arg1[%168, %c0_79, %c0_80] : memref<8x4x128xf32, #tpu.memory_space<vmem>>, vector<1x4x128xf32>
    %170 = vector.shape_cast %169 : vector<1x4x128xf32> to vector<4x128xf32>
    %171 = arith.addf %167, %170 : vector<4x128xf32>
    %172 = vector.extract_strided_slice %171 {offsets = [0, 0], sizes = [4, 32], strides = [1, 1]} : vector<4x128xf32> to vector<4x32xf32>
    %173 = arith.negf %172 : vector<4x32xf32>
    %174 = math.exp %173 : vector<4x32xf32>
    %cst_81 = arith.constant 1.000000e+00 : f32
    %175 = vector.broadcast %cst_81 : f32 to vector<4x32xf32>
    %176 = arith.addf %175, %174 : vector<4x32xf32>
    %177 = arith.divf %175, %176 : vector<4x32xf32>
    %178 = vector.extract_strided_slice %171 {offsets = [0, 32], sizes = [4, 32], strides = [1, 1]} : vector<4x128xf32> to vector<4x32xf32>
    %179 = arith.negf %178 : vector<4x32xf32>
    %180 = math.exp %179 : vector<4x32xf32>
    %cst_82 = arith.constant 1.000000e+00 : f32
    %181 = vector.broadcast %cst_82 : f32 to vector<4x32xf32>
    %182 = arith.addf %181, %180 : vector<4x32xf32>
    %183 = arith.divf %181, %182 : vector<4x32xf32>
    %184 = vector.extract_strided_slice %171 {offsets = [0, 64], sizes = [4, 32], strides = [1, 1]} : vector<4x128xf32> to vector<4x32xf32>
    %185 = math.tanh %184 : vector<4x32xf32>
    %186 = vector.extract_strided_slice %171 {offsets = [0, 96], sizes = [4, 32], strides = [1, 1]} : vector<4x128xf32> to vector<4x32xf32>
    %187 = arith.negf %186 : vector<4x32xf32>
    %188 = math.exp %187 : vector<4x32xf32>
    %cst_83 = arith.constant 1.000000e+00 : f32
    %189 = vector.broadcast %cst_83 : f32 to vector<4x32xf32>
    %190 = arith.addf %189, %188 : vector<4x32xf32>
    %191 = arith.divf %189, %190 : vector<4x32xf32>
    %192 = arith.mulf %183, %164 : vector<4x32xf32>
    %193 = arith.mulf %177, %185 : vector<4x32xf32>
    %194 = arith.addf %192, %193 : vector<4x32xf32>
    %195 = math.tanh %194 : vector<4x32xf32>
    %196 = arith.mulf %191, %195 : vector<4x32xf32>
    %c0_84 = arith.constant 0 : index
    %c0_85 = arith.constant 0 : index
    %197 = vector.load %arg8[%c0_84, %c0_85] : memref<4x32xf32, #tpu.memory_space<vmem>>, vector<4x32xf32>
    tpu.vector_store %arg8[%c0_84, %c0_85], %196 {strides = array<i32>} : memref<4x32xf32, #tpu.memory_space<vmem>>, vector<4x32xf32>,
    %c0_86 = arith.constant 0 : index
    %c0_87 = arith.constant 0 : index
    %198 = vector.load %arg9[%c0_86, %c0_87] : memref<4x32xf32, #tpu.memory_space<vmem>>, vector<4x32xf32>
    tpu.vector_store %arg9[%c0_86, %c0_87], %194 {strides = array<i32>} : memref<4x32xf32, #tpu.memory_space<vmem>>, vector<4x32xf32>,
    %199 = arith.index_cast %c4_i32 : i32 to index
    %c0_88 = arith.constant 0 : index
    %c0_89 = arith.constant 0 : index
    %200 = vector.load %arg5[%199, %c0_88, %c0_89] : memref<8x4x32xf32, #tpu.memory_space<vmem>>, vector<1x4x32xf32>
    %201 = vector.shape_cast %200 : vector<1x4x32xf32> to vector<4x32xf32>
    %202 = vector.shape_cast %196 : vector<4x32xf32> to vector<1x4x32xf32>
    tpu.vector_store %arg5[%199, %c0_88, %c0_89], %202 {strides = array<i32>} : memref<8x4x32xf32, #tpu.memory_space<vmem>>, vector<1x4x32xf32>,
    %c5_i32 = arith.constant 5 : i32
    %c0_90 = arith.constant 0 : index
    %c0_91 = arith.constant 0 : index
    %203 = vector.load %arg8[%c0_90, %c0_91] : memref<4x32xf32, #tpu.memory_space<vmem>>, vector<4x32xf32>
    %c0_92 = arith.constant 0 : index
    %c0_93 = arith.constant 0 : index
    %204 = vector.load %arg9[%c0_92, %c0_93] : memref<4x32xf32, #tpu.memory_space<vmem>>, vector<4x32xf32>
    %205 = arith.truncf %203 : vector<4x32xf32> to vector<4x32xbf16>
    %c0_94 = arith.constant 0 : index
    %c0_95 = arith.constant 0 : index
    %206 = vector.load %arg2[%c0_94, %c0_95] : memref<32x128xbf16, #tpu.memory_space<vmem>>, vector<32x128xbf16>
    %cst_96 = arith.constant dense<0.000000e+00> : vector<4x128xf32>
    %207 = tpu.matmul %205, %206, %cst_96 {dimension_numbers = #tpu.dot_dimension_numbers<[1], [0], [0], [1], [0, 0, 1, 1], [], []>} : vector<4x32xbf16>, vector<32x128xbf16>, vector<4x128xf32> -> vector<4x128xf32>
    %208 = arith.index_cast %c5_i32 : i32 to index
    %c0_97 = arith.constant 0 : index
    %c0_98 = arith.constant 0 : index
    %209 = vector.load %arg1[%208, %c0_97, %c0_98] : memref<8x4x128xf32, #tpu.memory_space<vmem>>, vector<1x4x128xf32>
    %210 = vector.shape_cast %209 : vector<1x4x128xf32> to vector<4x128xf32>
    %211 = arith.addf %207, %210 : vector<4x128xf32>
    %212 = vector.extract_strided_slice %211 {offsets = [0, 0], sizes = [4, 32], strides = [1, 1]} : vector<4x128xf32> to vector<4x32xf32>
    %213 = arith.negf %212 : vector<4x32xf32>
    %214 = math.exp %213 : vector<4x32xf32>
    %cst_99 = arith.constant 1.000000e+00 : f32
    %215 = vector.broadcast %cst_99 : f32 to vector<4x32xf32>
    %216 = arith.addf %215, %214 : vector<4x32xf32>
    %217 = arith.divf %215, %216 : vector<4x32xf32>
    %218 = vector.extract_strided_slice %211 {offsets = [0, 32], sizes = [4, 32], strides = [1, 1]} : vector<4x128xf32> to vector<4x32xf32>
    %219 = arith.negf %218 : vector<4x32xf32>
    %220 = math.exp %219 : vector<4x32xf32>
    %cst_100 = arith.constant 1.000000e+00 : f32
    %221 = vector.broadcast %cst_100 : f32 to vector<4x32xf32>
    %222 = arith.addf %221, %220 : vector<4x32xf32>
    %223 = arith.divf %221, %222 : vector<4x32xf32>
    %224 = vector.extract_strided_slice %211 {offsets = [0, 64], sizes = [4, 32], strides = [1, 1]} : vector<4x128xf32> to vector<4x32xf32>
    %225 = math.tanh %224 : vector<4x32xf32>
    %226 = vector.extract_strided_slice %211 {offsets = [0, 96], sizes = [4, 32], strides = [1, 1]} : vector<4x128xf32> to vector<4x32xf32>
    %227 = arith.negf %226 : vector<4x32xf32>
    %228 = math.exp %227 : vector<4x32xf32>
    %cst_101 = arith.constant 1.000000e+00 : f32
    %229 = vector.broadcast %cst_101 : f32 to vector<4x32xf32>
    %230 = arith.addf %229, %228 : vector<4x32xf32>
    %231 = arith.divf %229, %230 : vector<4x32xf32>
    %232 = arith.mulf %223, %204 : vector<4x32xf32>
    %233 = arith.mulf %217, %225 : vector<4x32xf32>
    %234 = arith.addf %232, %233 : vector<4x32xf32>
    %235 = math.tanh %234 : vector<4x32xf32>
    %236 = arith.mulf %231, %235 : vector<4x32xf32>
    %c0_102 = arith.constant 0 : index
    %c0_103 = arith.constant 0 : index
    %237 = vector.load %arg8[%c0_102, %c0_103] : memref<4x32xf32, #tpu.memory_space<vmem>>, vector<4x32xf32>
    tpu.vector_store %arg8[%c0_102, %c0_103], %236 {strides = array<i32>} : memref<4x32xf32, #tpu.memory_space<vmem>>, vector<4x32xf32>,
    %c0_104 = arith.constant 0 : index
    %c0_105 = arith.constant 0 : index
    %238 = vector.load %arg9[%c0_104, %c0_105] : memref<4x32xf32, #tpu.memory_space<vmem>>, vector<4x32xf32>
    tpu.vector_store %arg9[%c0_104, %c0_105], %234 {strides = array<i32>} : memref<4x32xf32, #tpu.memory_space<vmem>>, vector<4x32xf32>,
    %239 = arith.index_cast %c5_i32 : i32 to index
    %c0_106 = arith.constant 0 : index
    %c0_107 = arith.constant 0 : index
    %240 = vector.load %arg5[%239, %c0_106, %c0_107] : memref<8x4x32xf32, #tpu.memory_space<vmem>>, vector<1x4x32xf32>
    %241 = vector.shape_cast %240 : vector<1x4x32xf32> to vector<4x32xf32>
    %242 = vector.shape_cast %236 : vector<4x32xf32> to vector<1x4x32xf32>
    tpu.vector_store %arg5[%239, %c0_106, %c0_107], %242 {strides = array<i32>} : memref<8x4x32xf32, #tpu.memory_space<vmem>>, vector<1x4x32xf32>,
    %c6_i32 = arith.constant 6 : i32
    %c0_108 = arith.constant 0 : index
    %c0_109 = arith.constant 0 : index
    %243 = vector.load %arg8[%c0_108, %c0_109] : memref<4x32xf32, #tpu.memory_space<vmem>>, vector<4x32xf32>
    %c0_110 = arith.constant 0 : index
    %c0_111 = arith.constant 0 : index
    %244 = vector.load %arg9[%c0_110, %c0_111] : memref<4x32xf32, #tpu.memory_space<vmem>>, vector<4x32xf32>
    %245 = arith.truncf %243 : vector<4x32xf32> to vector<4x32xbf16>
    %c0_112 = arith.constant 0 : index
    %c0_113 = arith.constant 0 : index
    %246 = vector.load %arg2[%c0_112, %c0_113] : memref<32x128xbf16, #tpu.memory_space<vmem>>, vector<32x128xbf16>
    %cst_114 = arith.constant dense<0.000000e+00> : vector<4x128xf32>
    %247 = tpu.matmul %245, %246, %cst_114 {dimension_numbers = #tpu.dot_dimension_numbers<[1], [0], [0], [1], [0, 0, 1, 1], [], []>} : vector<4x32xbf16>, vector<32x128xbf16>, vector<4x128xf32> -> vector<4x128xf32>
    %248 = arith.index_cast %c6_i32 : i32 to index
    %c0_115 = arith.constant 0 : index
    %c0_116 = arith.constant 0 : index
    %249 = vector.load %arg1[%248, %c0_115, %c0_116] : memref<8x4x128xf32, #tpu.memory_space<vmem>>, vector<1x4x128xf32>
    %250 = vector.shape_cast %249 : vector<1x4x128xf32> to vector<4x128xf32>
    %251 = arith.addf %247, %250 : vector<4x128xf32>
    %252 = vector.extract_strided_slice %251 {offsets = [0, 0], sizes = [4, 32], strides = [1, 1]} : vector<4x128xf32> to vector<4x32xf32>
    %253 = arith.negf %252 : vector<4x32xf32>
    %254 = math.exp %253 : vector<4x32xf32>
    %cst_117 = arith.constant 1.000000e+00 : f32
    %255 = vector.broadcast %cst_117 : f32 to vector<4x32xf32>
    %256 = arith.addf %255, %254 : vector<4x32xf32>
    %257 = arith.divf %255, %256 : vector<4x32xf32>
    %258 = vector.extract_strided_slice %251 {offsets = [0, 32], sizes = [4, 32], strides = [1, 1]} : vector<4x128xf32> to vector<4x32xf32>
    %259 = arith.negf %258 : vector<4x32xf32>
    %260 = math.exp %259 : vector<4x32xf32>
    %cst_118 = arith.constant 1.000000e+00 : f32
    %261 = vector.broadcast %cst_118 : f32 to vector<4x32xf32>
    %262 = arith.addf %261, %260 : vector<4x32xf32>
    %263 = arith.divf %261, %262 : vector<4x32xf32>
    %264 = vector.extract_strided_slice %251 {offsets = [0, 64], sizes = [4, 32], strides = [1, 1]} : vector<4x128xf32> to vector<4x32xf32>
    %265 = math.tanh %264 : vector<4x32xf32>
    %266 = vector.extract_strided_slice %251 {offsets = [0, 96], sizes = [4, 32], strides = [1, 1]} : vector<4x128xf32> to vector<4x32xf32>
    %267 = arith.negf %266 : vector<4x32xf32>
    %268 = math.exp %267 : vector<4x32xf32>
    %cst_119 = arith.constant 1.000000e+00 : f32
    %269 = vector.broadcast %cst_119 : f32 to vector<4x32xf32>
    %270 = arith.addf %269, %268 : vector<4x32xf32>
    %271 = arith.divf %269, %270 : vector<4x32xf32>
    %272 = arith.mulf %263, %244 : vector<4x32xf32>
    %273 = arith.mulf %257, %265 : vector<4x32xf32>
    %274 = arith.addf %272, %273 : vector<4x32xf32>
    %275 = math.tanh %274 : vector<4x32xf32>
    %276 = arith.mulf %271, %275 : vector<4x32xf32>
    %c0_120 = arith.constant 0 : index
    %c0_121 = arith.constant 0 : index
    %277 = vector.load %arg8[%c0_120, %c0_121] : memref<4x32xf32, #tpu.memory_space<vmem>>, vector<4x32xf32>
    tpu.vector_store %arg8[%c0_120, %c0_121], %276 {strides = array<i32>} : memref<4x32xf32, #tpu.memory_space<vmem>>, vector<4x32xf32>,
    %c0_122 = arith.constant 0 : index
    %c0_123 = arith.constant 0 : index
    %278 = vector.load %arg9[%c0_122, %c0_123] : memref<4x32xf32, #tpu.memory_space<vmem>>, vector<4x32xf32>
    tpu.vector_store %arg9[%c0_122, %c0_123], %274 {strides = array<i32>} : memref<4x32xf32, #tpu.memory_space<vmem>>, vector<4x32xf32>,
    %279 = arith.index_cast %c6_i32 : i32 to index
    %c0_124 = arith.constant 0 : index
    %c0_125 = arith.constant 0 : index
    %280 = vector.load %arg5[%279, %c0_124, %c0_125] : memref<8x4x32xf32, #tpu.memory_space<vmem>>, vector<1x4x32xf32>
    %281 = vector.shape_cast %280 : vector<1x4x32xf32> to vector<4x32xf32>
    %282 = vector.shape_cast %276 : vector<4x32xf32> to vector<1x4x32xf32>
    tpu.vector_store %arg5[%279, %c0_124, %c0_125], %282 {strides = array<i32>} : memref<8x4x32xf32, #tpu.memory_space<vmem>>, vector<1x4x32xf32>,
    %c7_i32 = arith.constant 7 : i32
    %c0_126 = arith.constant 0 : index
    %c0_127 = arith.constant 0 : index
    %283 = vector.load %arg8[%c0_126, %c0_127] : memref<4x32xf32, #tpu.memory_space<vmem>>, vector<4x32xf32>
    %c0_128 = arith.constant 0 : index
    %c0_129 = arith.constant 0 : index
    %284 = vector.load %arg9[%c0_128, %c0_129] : memref<4x32xf32, #tpu.memory_space<vmem>>, vector<4x32xf32>
    %285 = arith.truncf %283 : vector<4x32xf32> to vector<4x32xbf16>
    %c0_130 = arith.constant 0 : index
    %c0_131 = arith.constant 0 : index
    %286 = vector.load %arg2[%c0_130, %c0_131] : memref<32x128xbf16, #tpu.memory_space<vmem>>, vector<32x128xbf16>
    %cst_132 = arith.constant dense<0.000000e+00> : vector<4x128xf32>
    %287 = tpu.matmul %285, %286, %cst_132 {dimension_numbers = #tpu.dot_dimension_numbers<[1], [0], [0], [1], [0, 0, 1, 1], [], []>} : vector<4x32xbf16>, vector<32x128xbf16>, vector<4x128xf32> -> vector<4x128xf32>
    %288 = arith.index_cast %c7_i32 : i32 to index
    %c0_133 = arith.constant 0 : index
    %c0_134 = arith.constant 0 : index
    %289 = vector.load %arg1[%288, %c0_133, %c0_134] : memref<8x4x128xf32, #tpu.memory_space<vmem>>, vector<1x4x128xf32>
    %290 = vector.shape_cast %289 : vector<1x4x128xf32> to vector<4x128xf32>
    %291 = arith.addf %287, %290 : vector<4x128xf32>
    %292 = vector.extract_strided_slice %291 {offsets = [0, 0], sizes = [4, 32], strides = [1, 1]} : vector<4x128xf32> to vector<4x32xf32>
    %293 = arith.negf %292 : vector<4x32xf32>
    %294 = math.exp %293 : vector<4x32xf32>
    %cst_135 = arith.constant 1.000000e+00 : f32
    %295 = vector.broadcast %cst_135 : f32 to vector<4x32xf32>
    %296 = arith.addf %295, %294 : vector<4x32xf32>
    %297 = arith.divf %295, %296 : vector<4x32xf32>
    %298 = vector.extract_strided_slice %291 {offsets = [0, 32], sizes = [4, 32], strides = [1, 1]} : vector<4x128xf32> to vector<4x32xf32>
    %299 = arith.negf %298 : vector<4x32xf32>
    %300 = math.exp %299 : vector<4x32xf32>
    %cst_136 = arith.constant 1.000000e+00 : f32
    %301 = vector.broadcast %cst_136 : f32 to vector<4x32xf32>
    %302 = arith.addf %301, %300 : vector<4x32xf32>
    %303 = arith.divf %301, %302 : vector<4x32xf32>
    %304 = vector.extract_strided_slice %291 {offsets = [0, 64], sizes = [4, 32], strides = [1, 1]} : vector<4x128xf32> to vector<4x32xf32>
    %305 = math.tanh %304 : vector<4x32xf32>
    %306 = vector.extract_strided_slice %291 {offsets = [0, 96], sizes = [4, 32], strides = [1, 1]} : vector<4x128xf32> to vector<4x32xf32>
    %307 = arith.negf %306 : vector<4x32xf32>
    %308 = math.exp %307 : vector<4x32xf32>
    %cst_137 = arith.constant 1.000000e+00 : f32
    %309 = vector.broadcast %cst_137 : f32 to vector<4x32xf32>
    %310 = arith.addf %309, %308 : vector<4x32xf32>
    %311 = arith.divf %309, %310 : vector<4x32xf32>
    %312 = arith.mulf %303, %284 : vector<4x32xf32>
    %313 = arith.mulf %297, %305 : vector<4x32xf32>
    %314 = arith.addf %312, %313 : vector<4x32xf32>
    %315 = math.tanh %314 : vector<4x32xf32>
    %316 = arith.mulf %311, %315 : vector<4x32xf32>
    %c0_138 = arith.constant 0 : index
    %c0_139 = arith.constant 0 : index
    %317 = vector.load %arg8[%c0_138, %c0_139] : memref<4x32xf32, #tpu.memory_space<vmem>>, vector<4x32xf32>
    tpu.vector_store %arg8[%c0_138, %c0_139], %316 {strides = array<i32>} : memref<4x32xf32, #tpu.memory_space<vmem>>, vector<4x32xf32>,
    %c0_140 = arith.constant 0 : index
    %c0_141 = arith.constant 0 : index
    %318 = vector.load %arg9[%c0_140, %c0_141] : memref<4x32xf32, #tpu.memory_space<vmem>>, vector<4x32xf32>
    tpu.vector_store %arg9[%c0_140, %c0_141], %314 {strides = array<i32>} : memref<4x32xf32, #tpu.memory_space<vmem>>, vector<4x32xf32>,
    %319 = arith.index_cast %c7_i32 : i32 to index
    %c0_142 = arith.constant 0 : index
    %c0_143 = arith.constant 0 : index
    %320 = vector.load %arg5[%319, %c0_142, %c0_143] : memref<8x4x32xf32, #tpu.memory_space<vmem>>, vector<1x4x32xf32>
    %321 = vector.shape_cast %320 : vector<1x4x32xf32> to vector<4x32xf32>
    %322 = vector.shape_cast %316 : vector<4x32xf32> to vector<1x4x32xf32>
    tpu.vector_store %arg5[%319, %c0_142, %c0_143], %322 {strides = array<i32>} : memref<8x4x32xf32, #tpu.memory_space<vmem>>, vector<1x4x32xf32>,
    %c8_i32 = arith.constant 8 : i32
    %c0_i32_144 = arith.constant 0 : i32
    %323 = arith.cmpi eq, %arg0, %c0_i32_144 : i32
    %324 = arith.extui %323 : i1 to i32
    %c0_i32_145 = arith.constant 0 : i32
    %325 = arith.cmpi ne, %324, %c0_i32_145 : i32
    scf.if %325 {
      %c0_146 = arith.constant 0 : index
      %c0_147 = arith.constant 0 : index
      %326 = vector.load %arg8[%c0_146, %c0_147] : memref<4x32xf32, #tpu.memory_space<vmem>>, vector<4x32xf32>
      %c0_148 = arith.constant 0 : index
      %c0_149 = arith.constant 0 : index
      %327 = vector.load %arg6[%c0_148, %c0_149] : memref<4x32xf32, #tpu.memory_space<vmem>>, vector<4x32xf32>
      tpu.vector_store %arg6[%c0_148, %c0_149], %326 {strides = array<i32>} : memref<4x32xf32, #tpu.memory_space<vmem>>, vector<4x32xf32>,
      %c0_150 = arith.constant 0 : index
      %c0_151 = arith.constant 0 : index
      %328 = vector.load %arg9[%c0_150, %c0_151] : memref<4x32xf32, #tpu.memory_space<vmem>>, vector<4x32xf32>
      %c0_152 = arith.constant 0 : index
      %c0_153 = arith.constant 0 : index
      %329 = vector.load %arg7[%c0_152, %c0_153] : memref<4x32xf32, #tpu.memory_space<vmem>>, vector<4x32xf32>
      tpu.vector_store %arg7[%c0_152, %c0_153], %328 {strides = array<i32>} : memref<4x32xf32, #tpu.memory_space<vmem>>, vector<4x32xf32>,
    } else {
    }
    return
  }
  func.func @transform_0(%arg0: i32) -> (i32, i32, i32) {
    %c0_i32 = arith.constant 0 : i32
    %c0_i32_0 = arith.constant 0 : i32
    %c0_i32_1 = arith.constant 0 : i32
    return %arg0, %c0_i32, %c0_i32_0 : i32, i32, i32
  }
  func.func @transform_1(%arg0: i32) -> (i32, i32) {
    %c0_i32 = arith.constant 0 : i32
    %c0_i32_0 = arith.constant 0 : i32
    %c0_i32_1 = arith.constant 0 : i32
    return %c0_i32, %c0_i32_0 : i32, i32
  }
  func.func @transform_2(%arg0: i32) -> (i32, i32) {
    %c0_i32 = arith.constant 0 : i32
    %c0_i32_0 = arith.constant 0 : i32
    %c0_i32_1 = arith.constant 0 : i32
    return %c0_i32, %c0_i32_0 : i32, i32
  }
  func.func @transform_3(%arg0: i32) -> (i32, i32) {
    %c0_i32 = arith.constant 0 : i32
    %c0_i32_0 = arith.constant 0 : i32
    %c0_i32_1 = arith.constant 0 : i32
    return %c0_i32, %c0_i32_0 : i32, i32
  }
  func.func @transform_4(%arg0: i32) -> (i32, i32, i32) {
    %c0_i32 = arith.constant 0 : i32
    %c0_i32_0 = arith.constant 0 : i32
    %c0_i32_1 = arith.constant 0 : i32
    return %arg0, %c0_i32, %c0_i32_0 : i32, i32, i32
  }
  func.func @transform_5(%arg0: i32) -> (i32, i32) {
    %c0_i32 = arith.constant 0 : i32
    %c0_i32_0 = arith.constant 0 : i32
    %c0_i32_1 = arith.constant 0 : i32
    return %c0_i32, %c0_i32_0 : i32, i32
  }
  func.func @transform_6(%arg0: i32) -> (i32, i32) {
    %c0_i32 = arith.constant 0 : i32
    %c0_i32_0 = arith.constant 0 : i32
    %c0_i32_1 = arith.constant 0 : i32
    return %c0_i32, %c0_i32_0 : i32, i32
  }
}

module attributes {stable_mosaic.version = 11 : i64} {
  func.func @_matmul_bias_kernel(%arg0: i32, %arg1: memref<32x32xbf16, #tpu.memory_space<vmem>>, %arg2: memref<32x128xbf16, #tpu.memory_space<vmem>>, %arg3: memref<1x128xf32, #tpu.memory_space<vmem>>, %arg4: memref<32x128xf32, #tpu.memory_space<vmem>>) attributes {dimension_semantics = [#tpu.dimension_semantics<parallel>], iteration_bounds = array<i64: 1>, scalar_prefetch = 0 : i64, scratch_operands = 0 : i64, tpu.core_type = #tpu.core_type<tc>, window_params = [{pipeline_mode = #tpu.pipeline_mode<synchronous>, transform_indices = @transform_0, window_bounds = array<i64: 32, 32>}, {transform_indices = @transform_1, window_bounds = array<i64: 32, 128>}, {transform_indices = @transform_2, window_bounds = array<i64: 1, 128>}, {transform_indices = @transform_3, window_bounds = array<i64: 32, 128>}]} {
    %c0 = arith.constant 0 : index
    %c0_0 = arith.constant 0 : index
    %0 = vector.load %arg1[%c0, %c0_0] : memref<32x32xbf16, #tpu.memory_space<vmem>>, vector<32x32xbf16>
    %c0_1 = arith.constant 0 : index
    %c0_2 = arith.constant 0 : index
    %1 = vector.load %arg2[%c0_1, %c0_2] : memref<32x128xbf16, #tpu.memory_space<vmem>>, vector<32x128xbf16>
    %cst = arith.constant dense<0.000000e+00> : vector<32x128xf32>
    %2 = tpu.matmul %0, %1, %cst {dimension_numbers = #tpu.dot_dimension_numbers<[1], [0], [0], [1], [0, 0, 1, 1], [], []>} : vector<32x32xbf16>, vector<32x128xbf16>, vector<32x128xf32> -> vector<32x128xf32>
    %c0_3 = arith.constant 0 : index
    %c0_4 = arith.constant 0 : index
    %3 = vector.load %arg3[%c0_3, %c0_4] : memref<1x128xf32, #tpu.memory_space<vmem>>, vector<1x128xf32>
    %4 = vector.broadcast %3 : vector<1x128xf32> to vector<32x128xf32>
    %5 = arith.addf %2, %4 : vector<32x128xf32>
    %c0_5 = arith.constant 0 : index
    %c0_6 = arith.constant 0 : index
    %6 = vector.load %arg4[%c0_5, %c0_6] : memref<32x128xf32, #tpu.memory_space<vmem>>, vector<32x128xf32>
    tpu.vector_store %arg4[%c0_5, %c0_6], %5 {strides = array<i32>} : memref<32x128xf32, #tpu.memory_space<vmem>>, vector<32x128xf32>,
    return
  }
  func.func @transform_0(%arg0: i32) -> (i32, i32) {
    %c0_i32 = arith.constant 0 : i32
    %c0_i32_0 = arith.constant 0 : i32
    %c0_i32_1 = arith.constant 0 : i32
    return %c0_i32, %c0_i32_0 : i32, i32
  }
  func.func @transform_1(%arg0: i32) -> (i32, i32) {
    %c0_i32 = arith.constant 0 : i32
    %c0_i32_0 = arith.constant 0 : i32
    return %c0_i32, %arg0 : i32, i32
  }
  func.func @transform_2(%arg0: i32) -> (i32, i32) {
    %c0_i32 = arith.constant 0 : i32
    %c0_i32_0 = arith.constant 0 : i32
    return %c0_i32, %arg0 : i32, i32
  }
  func.func @transform_3(%arg0: i32) -> (i32, i32) {
    %c0_i32 = arith.constant 0 : i32
    %c0_i32_0 = arith.constant 0 : i32
    return %c0_i32, %arg0 : i32, i32
  }
}

</mosaic_0001>

<llo_original>
// kernel: tedlium_forward.5
$region0: #{tedlium_forward.5}
  #allocation0 [shape = 'u32[]', space=smem, size = 0x4, offset = 0x4, fixed_abs, tag = 'smem constant byte address 0x4 - core index']
  #allocation1 [shape = 'u32[144,128]{1,0:T(1,128)}', space=vmem, size = 0x12000, scoped, tag = 'internal scratch']
  %s0 = inlined_call_operand.vmem [shape: bf16[32,56], index: 0, kind: input, shape index: {}]
  %s1 = inlined_call_operand.vmem [shape: bf16[56,128], index: 1, kind: input, shape index: {}]
  %s2 = inlined_call_operand.vmem [shape: f32[1,128], index: 2, kind: input, shape index: {}]
  %s3 = inlined_call_operand.vmem [shape: f32[32,128], index: 3, kind: output, shape index: {}]
  %s4 = sld [smem:[#allocation0]]
  $region22: #{tedlium_forward.5} parent=0
    _
  %s6 = ssub.s32 1, %s4
  %s7 = scalar_select 0, %s6, %s4
  // Predicated region
  $region2: #{tedlium_forward.5} parent=0 // pred_check
    _
  $region3: #{tedlium_forward.5} parent=0 // pred_check_branch
    %9 = sbr.rel (0) target = $region5
  $region4: #{tedlium_forward.5} parent=0 // pred_region
    _
  $region5: #{tedlium_forward.5} parent=0 // pred_fallthru
    _
  // Predicated region
  $region6: #{tedlium_forward.5} parent=0 // pred_check
    _
  $region7: #{tedlium_forward.5} parent=0 // pred_check_branch
    %11 = sbr.rel (0) target = $region9
  $region8: #{tedlium_forward.5} parent=0 // pred_region
    _
  $region9: #{tedlium_forward.5} parent=0 // pred_fallthru
    _
  // Predicated region
  $region10: #{tedlium_forward.5} parent=0 // pred_check
    _
  $region11: #{tedlium_forward.5} parent=0 // pred_check_branch
    %13 = sbr.rel (0) target = $region13
  $region12: #{tedlium_forward.5} parent=0 // pred_region
    _
  $region13: #{tedlium_forward.5} parent=0 // pred_fallthru
    _
  %v15 = vld [vmem:[%s0] sm:$0xf]
  %v16 = vld [vmem:[%s0 + $0x4] sm:$0xf]
  %v17 = vld [vmem:[%s0 + $0x8] sm:$0xf]
  %v18 = vld [vmem:[%s0 + $0xc] sm:$0xf]
  %v19 = vld [vmem:[%s1] sm:$0xf]
  %v20 = vld [vmem:[%s1 + $0x4] sm:$0xf]
  %v21 = vld [vmem:[%s1 + $0x8] sm:$0xf]
  %v22 = vld [vmem:[%s1 + $0xc] sm:$0xf]
  %v23 = vld [vmem:[%s1 + $0x10] sm:$0xf]
  %v24 = vld [vmem:[%s1 + $0x14] sm:$0xf]
  %v25 = vld [vmem:[%s1 + $0x18] sm:$0xf]
  %v26 = vld [vmem:[%s2] sm:$0x1]
  %v28 = vlaneseq
  %v29 = vshrl.u32 %v28, 7
  %v30 = vsub.s32 0, %v29
  %v31 = vrot.slane %v26, %v30
  %v37 = vunpack.c.l.b16 %v15
  %v38 = vunpack.c.l.b16 %v16
  %v39 = vunpack.c.l.b16 %v17
  %v40 = vunpack.c.l.b16 %v18
  %v41 = vpack.c.b16 %v38, %v37
  %v42 = vpack.c.b16 %v40, %v39
  %v50 = vunpack.c.l.b16 %v19
  %v51 = vunpack.c.l.b16 %v20
  %v52 = vunpack.c.l.b16 %v21
  %v53 = vunpack.c.l.b16 %v22
  %v54 = vunpack.c.l.b16 %v23
  %v55 = vunpack.c.l.b16 %v24
  %v56 = vunpack.c.l.b16 %v25
  %v57 = vpack.c.b16 %v51, %v50
  %v58 = vpack.c.b16 %v53, %v52
  %v59 = vpack.c.b16 %v55, %v54
  %v60 = vpack.c.b16 %v56, %v56
  %vm64 = vcmask 457728
  %v66 = vsel %vm64, %v41, 0
  %v69 = vsel %vm64, %v42, 0
  %vm71 = vcmask 1043456
  %v73 = vsel %vm71, %v60, 0
  %75 = vmatprep.subr.bf16.mxu0 0
  %76 = vmatpush1.bf16.msra.mxu0 0
  %77 = vmatprep.subr.bf16.mxu0 0
  %78 = vmatpush1.bf16.msra.mxu0 0
  %79 = vmatprep.subr.bf16.mxu0 0
  %80 = vmatpush1.bf16.msra.mxu0 0
  %81 = vmatprep.subr.bf16.mxu0 0
  %82 = vmatpush1.bf16.msra.mxu0 0
  %83 = vmatprep.subr.bf16.mxu0 0
  %84 = vmatpush1.bf16.msra.mxu0 %v73
  %85 = vmatprep.subr.bf16.mxu0 0
  %86 = vmatpush1.bf16.msra.mxu0 %v59
  %87 = vmatprep.subr.bf16.mxu0 0
  %88 = vmatpush1.bf16.msra.mxu0 %v58
  %89 = vmatprep.subr.bf16.mxu0 0
  %90 = vmatpush1.bf16.msra.mxu0 %v57
  %91 = vmatprep.subr.bf16.mxu0 0
  %92 = vmatpush2.bf16.msra.mxu0 0
  %93 = vmatprep.subr.bf16.mxu0 0
  %94 = vmatpush2.bf16.msra.mxu0 0
  %95 = vmatprep.subr.bf16.mxu0 0
  %96 = vmatpush2.bf16.msra.mxu0 0
  %97 = vmatprep.subr.bf16.mxu0 0
  %98 = vmatpush2.bf16.msra.mxu0 0
  %99 = vmatprep.subr.bf16.mxu0 0
  %100 = vmatpush2.bf16.msra.mxu0 0
  %101 = vmatprep.subr.bf16.mxu0 0
  %102 = vmatpush2.bf16.msra.mxu0 0
  %103 = vmatprep.subr.bf16.mxu0 0
  %104 = vmatpush2.bf16.msra.mxu0 0
  %105 = vmatprep.subr.bf16.mxu0 0
  %106 = vmatpush2.bf16.msra.mxu0 0
  %107 = vmatprep.mubr.bf16.mxu0 0
  %108 = vmatmul.mubr.bf16.gmra.mxu0 %v66
  %v109 = vpop.f32.mrf.mxu0
  %v110 = vadd.f32 %v31, %v109
  %v111 = vpop.f32.mrf.mxu0
  %v112 = vpop.f32.mrf.mxu0
  %v113 = vadd.f32 %v31, %v112
  %v114 = vpop.f32.mrf.mxu0
  %115 = vmatprep.mubr.bf16.mxu0 0
  %116 = vmatmul.mubr.bf16.gmra.mxu0 %v69
  %v117 = vpop.f32.mrf.mxu0
  %v118 = vadd.f32 %v31, %v117
  %v119 = vpop.f32.mrf.mxu0
  %v120 = vpop.f32.mrf.mxu0
  %v121 = vadd.f32 %v31, %v120
  %v122 = vpop.f32.mrf.mxu0
  %123 = vdwg.mxu0
  %124 = vst [vmem:[%s3] sm:$0xff] %v110
  %125 = vst [vmem:[%s3 + $0x8] sm:$0xff] %v113
  %126 = vst [vmem:[%s3 + $0x10] sm:$0xff] %v118
  %127 = vst [vmem:[%s3 + $0x18] sm:$0xff] %v121
  // Predicated region
  $region14: #{tedlium_forward.5} parent=0 // pred_check
    _
  $region15: #{tedlium_forward.5} parent=0 // pred_check_branch
    %129 = sbr.rel (0) target = $region17
  $region16: #{tedlium_forward.5} parent=0 // pred_region
    _
  $region17: #{tedlium_forward.5} parent=0 // pred_fallthru
    _
  // Predicated region
  $region18: #{tedlium_forward.5} parent=0 // pred_check
    _
  $region19: #{tedlium_forward.5} parent=0 // pred_check_branch
    %131 = sbr.rel (0) target = $region21
  $region20: #{tedlium_forward.5} parent=0 // pred_region
    _
  $region21: #{tedlium_forward.5} parent=0 // pred_fallthru
    _

// kernel: tedlium_forward.7
$region0: #{tedlium_forward.7}
  #allocation0 [shape = 'u32[]', space=smem, size = 0x4, offset = 0x4, fixed_abs, tag = 'smem constant byte address 0x4 - core index']
  #allocation1 [shape = 'u32[144,128]{1,0:T(1,128)}', space=vmem, size = 0x12000, scoped, tag = 'internal scratch']
  %s0 = inlined_call_operand.vmem [shape: bf16[32,32], index: 0, kind: input, shape index: {}]
  %s1 = inlined_call_operand.vmem [shape: bf16[32,128], index: 1, kind: input, shape index: {}]
  %s2 = inlined_call_operand.vmem [shape: f32[1,128], index: 2, kind: input, shape index: {}]
  %s3 = inlined_call_operand.vmem [shape: f32[32,128], index: 3, kind: output, shape index: {}]
  %s4 = sld [smem:[#allocation0]]
  $region22: #{tedlium_forward.7} parent=0
    _
  %s6 = ssub.s32 1, %s4
  %s7 = scalar_select 0, %s6, %s4
  // Predicated region
  $region2: #{tedlium_forward.7} parent=0 // pred_check
    _
  $region3: #{tedlium_forward.7} parent=0 // pred_check_branch
    %9 = sbr.rel (0) target = $region5
  $region4: #{tedlium_forward.7} parent=0 // pred_region
    _
  $region5: #{tedlium_forward.7} parent=0 // pred_fallthru
    _
  // Predicated region
  $region6: #{tedlium_forward.7} parent=0 // pred_check
    _
  $region7: #{tedlium_forward.7} parent=0 // pred_check_branch
    %11 = sbr.rel (0) target = $region9
  $region8: #{tedlium_forward.7} parent=0 // pred_region
    _
  $region9: #{tedlium_forward.7} parent=0 // pred_fallthru
    _
  // Predicated region
  $region10: #{tedlium_forward.7} parent=0 // pred_check
    _
  $region11: #{tedlium_forward.7} parent=0 // pred_check_branch
    %13 = sbr.rel (0) target = $region13
  $region12: #{tedlium_forward.7} parent=0 // pred_region
    _
  $region13: #{tedlium_forward.7} parent=0 // pred_fallthru
    _
  %v15 = vld [vmem:[%s0] sm:$0xf]
  %v16 = vld [vmem:[%s0 + $0x4] sm:$0xf]
  %v17 = vld [vmem:[%s0 + $0x8] sm:$0xf]
  %v18 = vld [vmem:[%s0 + $0xc] sm:$0xf]
  %v19 = vld [vmem:[%s1] sm:$0xf]
  %v20 = vld [vmem:[%s1 + $0x4] sm:$0xf]
  %v21 = vld [vmem:[%s1 + $0x8] sm:$0xf]
  %v22 = vld [vmem:[%s1 + $0xc] sm:$0xf]
  %v23 = vld [vmem:[%s2] sm:$0x1]
  %v25 = vlaneseq
  %v26 = vshrl.u32 %v25, 7
  %v27 = vsub.s32 0, %v26
  %v28 = vrot.slane %v23, %v27
  %v34 = vunpack.c.l.b16 %v15
  %v35 = vunpack.c.l.b16 %v16
  %v36 = vunpack.c.l.b16 %v17
  %v37 = vunpack.c.l.b16 %v18
  %v38 = vpack.c.b16 %v35, %v34
  %v39 = vpack.c.b16 %v37, %v36
  %v44 = vunpack.c.l.b16 %v19
  %v45 = vunpack.c.l.b16 %v20
  %v46 = vunpack.c.l.b16 %v21
  %v47 = vunpack.c.l.b16 %v22
  %v48 = vpack.c.b16 %v45, %v44
  %v49 = vpack.c.b16 %v47, %v46
  %vm52 = vcmask 261120
  %v54 = vsel %vm52, %v38, 0
  %v57 = vsel %vm52, %v39, 0
  %59 = vmatprep.subr.bf16.mxu0 0
  %60 = vmatpush1.bf16.msra.mxu0 0
  %61 = vmatprep.subr.bf16.mxu0 0
  %62 = vmatpush1.bf16.msra.mxu0 0
  %63 = vmatprep.subr.bf16.mxu0 0
  %64 = vmatpush1.bf16.msra.mxu0 0
  %65 = vmatprep.subr.bf16.mxu0 0
  %66 = vmatpush1.bf16.msra.mxu0 0
  %67 = vmatprep.subr.bf16.mxu0 0
  %68 = vmatpush1.bf16.msra.mxu0 0
  %69 = vmatprep.subr.bf16.mxu0 0
  %70 = vmatpush1.bf16.msra.mxu0 0
  %71 = vmatprep.subr.bf16.mxu0 0
  %72 = vmatpush1.bf16.msra.mxu0 %v49
  %73 = vmatprep.subr.bf16.mxu0 0
  %74 = vmatpush1.bf16.msra.mxu0 %v48
  %75 = vmatprep.subr.bf16.mxu0 0
  %76 = vmatpush2.bf16.msra.mxu0 0
  %77 = vmatprep.subr.bf16.mxu0 0
  %78 = vmatpush2.bf16.msra.mxu0 0
  %79 = vmatprep.subr.bf16.mxu0 0
  %80 = vmatpush2.bf16.msra.mxu0 0
  %81 = vmatprep.subr.bf16.mxu0 0
  %82 = vmatpush2.bf16.msra.mxu0 0
  %83 = vmatprep.subr.bf16.mxu0 0
  %84 = vmatpush2.bf16.msra.mxu0 0
  %85 = vmatprep.subr.bf16.mxu0 0
  %86 = vmatpush2.bf16.msra.mxu0 0
  %87 = vmatprep.subr.bf16.mxu0 0
  %88 = vmatpush2.bf16.msra.mxu0 0
  %89 = vmatprep.subr.bf16.mxu0 0
  %90 = vmatpush2.bf16.msra.mxu0 0
  %91 = vmatprep.mubr.bf16.mxu0 0
  %92 = vmatmul.mubr.bf16.gmra.mxu0 %v54
  %v93 = vpop.f32.mrf.mxu0
  %v94 = vadd.f32 %v28, %v93
  %v95 = vpop.f32.mrf.mxu0
  %v96 = vpop.f32.mrf.mxu0
  %v97 = vadd.f32 %v28, %v96
  %v98 = vpop.f32.mrf.mxu0
  %99 = vmatprep.mubr.bf16.mxu0 0
  %100 = vmatmul.mubr.bf16.gmra.mxu0 %v57
  %v101 = vpop.f32.mrf.mxu0
  %v102 = vadd.f32 %v28, %v101
  %v103 = vpop.f32.mrf.mxu0
  %v104 = vpop.f32.mrf.mxu0
  %v105 = vadd.f32 %v28, %v104
  %v106 = vpop.f32.mrf.mxu0
  %107 = vdwg.mxu0
  %108 = vst [vmem:[%s3] sm:$0xff] %v94
  %109 = vst [vmem:[%s3 + $0x8] sm:$0xff] %v97
  %110 = vst [vmem:[%s3 + $0x10] sm:$0xff] %v102
  %111 = vst [vmem:[%s3 + $0x18] sm:$0xff] %v105
  // Predicated region
  $region14: #{tedlium_forward.7} parent=0 // pred_check
    _
  $region15: #{tedlium_forward.7} parent=0 // pred_check_branch
    %113 = sbr.rel (0) target = $region17
  $region16: #{tedlium_forward.7} parent=0 // pred_region
    _
  $region17: #{tedlium_forward.7} parent=0 // pred_fallthru
    _
  // Predicated region
  $region18: #{tedlium_forward.7} parent=0 // pred_check
    _
  $region19: #{tedlium_forward.7} parent=0 // pred_check_branch
    %115 = sbr.rel (0) target = $region21
  $region20: #{tedlium_forward.7} parent=0 // pred_region
    _
  $region21: #{tedlium_forward.7} parent=0 // pred_fallthru
    _

// kernel: tedlium_forward.9
$region0: #{tedlium_forward.9}
  #allocation0 [shape = 'u32[]', space=smem, size = 0x4, offset = 0x4, fixed_abs, tag = 'smem constant byte address 0x4 - core index']
  #allocation1 [shape = 'u32[144,128]{1,0:T(1,128)}', space=vmem, size = 0x12000, scoped, tag = 'internal scratch']
  %s0 = inlined_call_operand.vmem [shape: bf16[32,32], index: 0, kind: input, shape index: {}]
  %s1 = inlined_call_operand.vmem [shape: bf16[32,128], index: 1, kind: input, shape index: {}]
  %s2 = inlined_call_operand.vmem [shape: f32[1,128], index: 2, kind: input, shape index: {}]
  %s3 = inlined_call_operand.hbm [shape: f32[32,128], index: 3, kind: output, shape index: {}]
  %s4 = sld [smem:[#allocation0]]
  $region22: #{tedlium_forward.9} parent=0
    _
  %s6 = ssub.s32 1, %s4
  %s7 = scalar_select 0, %s6, %s4
  $region1: #{tedlium_forward.9} parent=0
    #allocation2 [shape = 'u8[16384]{0}', space=vmem, size = 0x4000, scoped, tag = 'output window, operand 0, single buffered']
    #allocation3 [shape = 's32[1]{0}', space=sflag, size = 0x4, scoped, tag = 'scoped memory for tedlium_forward.9']
    %8 = vsyncpa [#allocation3], 0
    // Predicated region
    $region2: #{tedlium_forward.9} parent=1 // pred_check
      _
    $region3: #{tedlium_forward.9} parent=1 // pred_check_branch
      %10 = sbr.rel (0) target = $region5
    $region4: #{tedlium_forward.9} parent=1 // pred_region
      _
    $region5: #{tedlium_forward.9} parent=1 // pred_fallthru
      _
    // Predicated region
    $region6: #{tedlium_forward.9} parent=1 // pred_check
      _
    $region7: #{tedlium_forward.9} parent=1 // pred_check_branch
      %12 = sbr.rel (0) target = $region9
    $region8: #{tedlium_forward.9} parent=1 // pred_region
      _
    $region9: #{tedlium_forward.9} parent=1 // pred_fallthru
      _
    // Predicated region
    $region10: #{tedlium_forward.9} parent=1 // pred_check
      _
    $region11: #{tedlium_forward.9} parent=1 // pred_check_branch
      %14 = sbr.rel (0) target = $region13
    $region12: #{tedlium_forward.9} parent=1 // pred_region
      _
    $region13: #{tedlium_forward.9} parent=1 // pred_fallthru
      _
    %v16 = vld [vmem:[%s0] sm:$0xf]
    %v17 = vld [vmem:[%s0 + $0x4] sm:$0xf]
    %v18 = vld [vmem:[%s0 + $0x8] sm:$0xf]
    %v19 = vld [vmem:[%s0 + $0xc] sm:$0xf]
    %v20 = vld [vmem:[%s1] sm:$0xf]
    %v21 = vld [vmem:[%s1 + $0x4] sm:$0xf]
    %v22 = vld [vmem:[%s1 + $0x8] sm:$0xf]
    %v23 = vld [vmem:[%s1 + $0xc] sm:$0xf]
    %v24 = vld [vmem:[%s2] sm:$0x1]
    %v26 = vlaneseq
    %v27 = vshrl.u32 %v26, 7
    %v28 = vsub.s32 0, %v27
    %v29 = vrot.slane %v24, %v28
    %v35 = vunpack.c.l.b16 %v16
    %v36 = vunpack.c.l.b16 %v17
    %v37 = vunpack.c.l.b16 %v18
    %v38 = vunpack.c.l.b16 %v19
    %v39 = vpack.c.b16 %v36, %v35
    %v40 = vpack.c.b16 %v38, %v37
    %v45 = vunpack.c.l.b16 %v20
    %v46 = vunpack.c.l.b16 %v21
    %v47 = vunpack.c.l.b16 %v22
    %v48 = vunpack.c.l.b16 %v23
    %v49 = vpack.c.b16 %v46, %v45
    %v50 = vpack.c.b16 %v48, %v47
    %vm53 = vcmask 261120
    %v55 = vsel %vm53, %v39, 0
    %v58 = vsel %vm53, %v40, 0
    %60 = vmatprep.subr.bf16.mxu0 0
    %61 = vmatpush1.bf16.msra.mxu0 0
    %62 = vmatprep.subr.bf16.mxu0 0
    %63 = vmatpush1.bf16.msra.mxu0 0
    %64 = vmatprep.subr.bf16.mxu0 0
    %65 = vmatpush1.bf16.msra.mxu0 0
    %66 = vmatprep.subr.bf16.mxu0 0
    %67 = vmatpush1.bf16.msra.mxu0 0
    %68 = vmatprep.subr.bf16.mxu0 0
    %69 = vmatpush1.bf16.msra.mxu0 0
    %70 = vmatprep.subr.bf16.mxu0 0
    %71 = vmatpush1.bf16.msra.mxu0 0
    %72 = vmatprep.subr.bf16.mxu0 0
    %73 = vmatpush1.bf16.msra.mxu0 %v50
    %74 = vmatprep.subr.bf16.mxu0 0
    %75 = vmatpush1.bf16.msra.mxu0 %v49
    %76 = vmatprep.subr.bf16.mxu0 0
    %77 = vmatpush2.bf16.msra.mxu0 0
    %78 = vmatprep.subr.bf16.mxu0 0
    %79 = vmatpush2.bf16.msra.mxu0 0
    %80 = vmatprep.subr.bf16.mxu0 0
    %81 = vmatpush2.bf16.msra.mxu0 0
    %82 = vmatprep.subr.bf16.mxu0 0
    %83 = vmatpush2.bf16.msra.mxu0 0
    %84 = vmatprep.subr.bf16.mxu0 0
    %85 = vmatpush2.bf16.msra.mxu0 0
    %86 = vmatprep.subr.bf16.mxu0 0
    %87 = vmatpush2.bf16.msra.mxu0 0
    %88 = vmatprep.subr.bf16.mxu0 0
    %89 = vmatpush2.bf16.msra.mxu0 0
    %90 = vmatprep.subr.bf16.mxu0 0
    %91 = vmatpush2.bf16.msra.mxu0 0
    %92 = vmatprep.mubr.bf16.mxu0 0
    %93 = vmatmul.mubr.bf16.gmra.mxu0 %v55
    %v94 = vpop.f32.mrf.mxu0
    %v95 = vadd.f32 %v29, %v94
    %v96 = vpop.f32.mrf.mxu0
    %v97 = vpop.f32.mrf.mxu0
    %v98 = vadd.f32 %v29, %v97
    %v99 = vpop.f32.mrf.mxu0
    %100 = vmatprep.mubr.bf16.mxu0 0
    %101 = vmatmul.mubr.bf16.gmra.mxu0 %v58
    %v102 = vpop.f32.mrf.mxu0
    %v103 = vadd.f32 %v29, %v102
    %v104 = vpop.f32.mrf.mxu0
    %v105 = vpop.f32.mrf.mxu0
    %v106 = vadd.f32 %v29, %v105
    %v107 = vpop.f32.mrf.mxu0
    %108 = vdwg.mxu0
    %109 = vst [vmem:[#allocation2] sm:$0xff] %v95
    %110 = vst [vmem:[#allocation2 + $0x8] sm:$0xff] %v98
    %111 = vst [vmem:[#allocation2 + $0x10] sm:$0xff] %v103
    %112 = vst [vmem:[#allocation2 + $0x18] sm:$0xff] %v106
    // Predicated region
    $region14: #{tedlium_forward.9} parent=1 // pred_check
      _
    $region15: #{tedlium_forward.9} parent=1 // pred_check_branch
      %114 = sbr.rel (0) target = $region17
    $region16: #{tedlium_forward.9} parent=1 // pred_region
      %s116 = ssub.s32 512, 512
      %117 = vsyncadd [#allocation3], %s116
      %s118 = sshll.u32 [#allocation2], 4
      %s119 = int_to_ptr.vmem [resolvable:$true] %s118
      %124 = dma.vmem_to_hbm [thread:$0]  %s119, 512, %s3, [#allocation3], 128, 128, 8
    $region17: #{tedlium_forward.9} parent=1 // pred_fallthru
      _
    // Predicated region
    $region18: #{tedlium_forward.9} parent=1 // pred_check
      _
    $region19: #{tedlium_forward.9} parent=1 // pred_check_branch
      %126 = sbr.rel (0) target = $region21
    $region20: #{tedlium_forward.9} parent=1 // pred_region
      %127 = dma.done [#allocation3], 512
    $region21: #{tedlium_forward.9} parent=1 // pred_fallthru
      _
    %128 = vsyncpa [#allocation3], 1

// kernel: tedlium_forward.6
$region0: #{tedlium_forward.6}
  #allocation0 [shape = 'u32[]', space=smem, size = 0x4, offset = 0x4, fixed_abs, tag = 'smem constant byte address 0x4 - core index']
  #allocation1 [shape = 'u32[144,128]{1,0:T(1,128)}', space=vmem, size = 0x12000, scoped, tag = 'internal scratch']
  #allocation2 [shape = 'f32[4,32]{1,0:T(4,128)}', space=vmem, size = 0x800, scoped, tag = 'scratch operand']
  #allocation3 [shape = 'f32[4,32]{1,0:T(4,128)}', space=vmem, size = 0x800, scoped, tag = 'scratch operand']
  %s0 = inlined_call_operand.vmem [shape: f32[8,4,128], index: 0, kind: input, shape index: {}]
  %s1 = inlined_call_operand.vmem [shape: bf16[32,128], index: 1, kind: input, shape index: {}]
  %s2 = inlined_call_operand.vmem [shape: f32[4,32], index: 2, kind: input, shape index: {}]
  %s3 = inlined_call_operand.vmem [shape: f32[4,32], index: 3, kind: input, shape index: {}]
  %s4 = inlined_call_operand.vmem [shape: f32[8,4,32], index: 4, kind: output, shape index: {0}]
  %s5 = inlined_call_operand.vmem [shape: f32[4,32], index: 5, kind: output, shape index: {1}]
  %s6 = inlined_call_operand.vmem [shape: f32[4,32], index: 6, kind: output, shape index: {2}]
  %7 = xla_tuple %s4, %s5, %s6
  %s8 = sld [smem:[#allocation0]]
  $region50: #{tedlium_forward.6} parent=0
    _
  %s10 = ssub.s32 1, %s8
  %s11 = scalar_select 0, %s10, %s8
  // Predicated region
  $region2: #{tedlium_forward.6} parent=0 // pred_check
    _
  $region3: #{tedlium_forward.6} parent=0 // pred_check_branch
    %13 = sbr.rel (0) target = $region5
  $region4: #{tedlium_forward.6} parent=0 // pred_region
    _
  $region5: #{tedlium_forward.6} parent=0 // pred_fallthru
    _
  // Predicated region
  $region6: #{tedlium_forward.6} parent=0 // pred_check
    _
  $region7: #{tedlium_forward.6} parent=0 // pred_check_branch
    %15 = sbr.rel (0) target = $region9
  $region8: #{tedlium_forward.6} parent=0 // pred_region
    _
  $region9: #{tedlium_forward.6} parent=0 // pred_fallthru
    _
  // Predicated region
  $region10: #{tedlium_forward.6} parent=0 // pred_check
    _
  $region11: #{tedlium_forward.6} parent=0 // pred_check_branch
    %17 = sbr.rel (0) target = $region13
  $region12: #{tedlium_forward.6} parent=0 // pred_region
    _
  $region13: #{tedlium_forward.6} parent=0 // pred_fallthru
    _
  // Predicated region
  $region14: #{tedlium_forward.6} parent=0 // pred_check
    _
  $region15: #{tedlium_forward.6} parent=0 // pred_check_branch
    %19 = sbr.rel (0) target = $region17
  $region16: #{tedlium_forward.6} parent=0 // pred_region
    _
  $region17: #{tedlium_forward.6} parent=0 // pred_fallthru
    _
  %p21 = scmp.eq.s32.totalorder 0, 0
  // Predicated region
  $region18: #{tedlium_forward.6} parent=0 // pred_check
    %p22 = pneg %p21
  $region19: #{tedlium_forward.6} parent=0 // pred_check_branch
    %24 = sbr.rel (%p22) target = $region21
  $region20: #{tedlium_forward.6} parent=0 // pred_region
    %v25 = vld [vmem:[%s2] sm:$0xf]
    %vm26 = vcmask 257024
    %27 = vst.msk [vmem:[#allocation2] sm:$0xf] %vm26, %v25
    %v28 = vld [vmem:[%s3] sm:$0xf]
    %29 = vst.msk [vmem:[#allocation3] sm:$0xf] %vm26, %v28
  $region21: #{tedlium_forward.6} parent=0 // pred_fallthru
    _
  %v30 = vld [vmem:[#allocation2] sm:$0xf]
  %v31 = vld [vmem:[#allocation3] sm:$0xf]
  %v32 = vpack.c.bf16 %v30, %v30
  %v33 = vld [vmem:[%s1] sm:$0xf]
  %v34 = vld [vmem:[%s1 + $0x4] sm:$0xf]
  %v35 = vld [vmem:[%s1 + $0x8] sm:$0xf]
  %v36 = vld [vmem:[%s1 + $0xc] sm:$0xf]
  %v37 = vld [vmem:[%s0] sm:$0xf]
  %v42 = vunpack.c.l.b16 %v33
  %v43 = vunpack.c.l.b16 %v34
  %v44 = vunpack.c.l.b16 %v35
  %v45 = vunpack.c.l.b16 %v36
  %v46 = vpack.c.b16 %v43, %v42
  %v47 = vpack.c.b16 %v45, %v44
  %vm50 = vcmask 261120
  %v52 = vsel %vm50, %v32, 0
  %54 = vmatprep.subr.bf16.mxu0 0
  %55 = vmatpush1.bf16.msra.mxu0 0
  %56 = vmatprep.subr.bf16.mxu0 0
  %57 = vmatpush1.bf16.msra.mxu0 0
  %58 = vmatprep.subr.bf16.mxu0 0
  %59 = vmatpush1.bf16.msra.mxu0 0
  %60 = vmatprep.subr.bf16.mxu0 0
  %61 = vmatpush1.bf16.msra.mxu0 0
  %62 = vmatprep.subr.bf16.mxu0 0
  %63 = vmatpush1.bf16.msra.mxu0 0
  %64 = vmatprep.subr.bf16.mxu0 0
  %65 = vmatpush1.bf16.msra.mxu0 0
  %66 = vmatprep.subr.bf16.mxu0 0
  %67 = vmatpush1.bf16.msra.mxu0 %v47
  %68 = vmatprep.subr.bf16.mxu0 0
  %69 = vmatpush1.bf16.msra.mxu0 %v46
  %70 = vmatprep.subr.bf16.mxu0 0
  %71 = vmatpush2.bf16.msra.mxu0 0
  %72 = vmatprep.subr.bf16.mxu0 0
  %73 = vmatpush2.bf16.msra.mxu0 0
  %74 = vmatprep.subr.bf16.mxu0 0
  %75 = vmatpush2.bf16.msra.mxu0 0
  %76 = vmatprep.subr.bf16.mxu0 0
  %77 = vmatpush2.bf16.msra.mxu0 0
  %78 = vmatprep.subr.bf16.mxu0 0
  %79 = vmatpush2.bf16.msra.mxu0 0
  %80 = vmatprep.subr.bf16.mxu0 0
  %81 = vmatpush2.bf16.msra.mxu0 0
  %82 = vmatprep.subr.bf16.mxu0 0
  %83 = vmatpush2.bf16.msra.mxu0 0
  %84 = vmatprep.subr.bf16.mxu0 0
  %85 = vmatpush2.bf16.msra.mxu0 0
  %86 = vmatprep.mubr.bf16.mxu0 0
  %87 = vmatmul.mubr.bf16.gmra.mxu0 %v52
  %v88 = vpop.f32.mrf.mxu0
  %v89 = vadd.f32 %v37, %v88
  %v90 = vpop.f32.mrf.mxu0
  %v91 = vpop.f32.mrf.mxu0
  %v92 = vpop.f32.mrf.mxu0
  %93 = vdwg.mxu0
  %v94 = vxor.u32 %v89, 2147483648
  %v95 = vmul.f32 %v94, 1.442695
  %v96 = vpow.pop %v95
  %v97 = vadd.f32 %v96, 1.0
  %v98 = vrcp.pop %v97
  %v99 = vmul.f32 1.0, %v98
  %v100 = vtanh.pop %v89
  %102 = vrot.lane.b32.xlu0 %v31, 32
  %v103 = vpop.permute.xlu0 %102
  %v105 = vmul.f32 %v99, %v103
  %107 = vrot.lane.b32.xlu0 %v100, 64
  %v108 = vpop.permute.xlu0 %107
  %v110 = vmul.f32 %v99, %v108
  %112 = vrot.lane.b32.xlu0 %v110, 32
  %v113 = vpop.permute.xlu0 %112
  %v115 = vadd.f32 %v105, %v113
  %v116 = vtanh.pop %v115
  %118 = vrot.lane.b32.xlu0 %v116, 64
  %v119 = vpop.permute.xlu0 %118
  %v121 = vmul.f32 %v99, %v119
  %123 = vrot.lane.b32.xlu0 %v121, 32
  %v124 = vpop.permute.xlu0 %123
  %vm126 = vcmask 257024
  %127 = vst.msk [vmem:[#allocation2] sm:$0xf] %vm126, %v124
  %129 = vrot.lane.b32.xlu0 %v115, 96
  %v130 = vpop.permute.xlu0 %129
  %132 = vst.msk [vmem:[#allocation3] sm:$0xf] %vm126, %v130
  %133 = vst.msk [vmem:[%s4] sm:$0xf] %vm126, %v124
  %v134 = vld [vmem:[#allocation2] sm:$0xf]
  %v135 = vld [vmem:[#allocation3] sm:$0xf]
  %v136 = vpack.c.bf16 %v134, %v134
  %v137 = vld [vmem:[%s1] sm:$0xf]
  %v138 = vld [vmem:[%s1 + $0x4] sm:$0xf]
  %v139 = vld [vmem:[%s1 + $0x8] sm:$0xf]
  %v140 = vld [vmem:[%s1 + $0xc] sm:$0xf]
  %s141 = scalar_lea.vmem %s0, 4
  %v142 = vld [vmem:[%s141] sm:$0xf]
  %v147 = vunpack.c.l.b16 %v137
  %v148 = vunpack.c.l.b16 %v138
  %v149 = vunpack.c.l.b16 %v139
  %v150 = vunpack.c.l.b16 %v140
  %v151 = vpack.c.b16 %v148, %v147
  %v152 = vpack.c.b16 %v150, %v149
  %v156 = vsel %vm50, %v136, 0
  %158 = vmatprep.subr.bf16.mxu0 0
  %159 = vmatpush1.bf16.msra.mxu0 0
  %160 = vmatprep.subr.bf16.mxu0 0
  %161 = vmatpush1.bf16.msra.mxu0 0
  %162 = vmatprep.subr.bf16.mxu0 0
  %163 = vmatpush1.bf16.msra.mxu0 0
  %164 = vmatprep.subr.bf16.mxu0 0
  %165 = vmatpush1.bf16.msra.mxu0 0
  %166 = vmatprep.subr.bf16.mxu0 0
  %167 = vmatpush1.bf16.msra.mxu0 0
  %168 = vmatprep.subr.bf16.mxu0 0
  %169 = vmatpush1.bf16.msra.mxu0 0
  %170 = vmatprep.subr.bf16.mxu0 0
  %171 = vmatpush1.bf16.msra.mxu0 %v152
  %172 = vmatprep.subr.bf16.mxu0 0
  %173 = vmatpush1.bf16.msra.mxu0 %v151
  %174 = vmatprep.subr.bf16.mxu0 0
  %175 = vmatpush2.bf16.msra.mxu0 0
  %176 = vmatprep.subr.bf16.mxu0 0
  %177 = vmatpush2.bf16.msra.mxu0 0
  %178 = vmatprep.subr.bf16.mxu0 0
  %179 = vmatpush2.bf16.msra.mxu0 0
  %180 = vmatprep.subr.bf16.mxu0 0
  %181 = vmatpush2.bf16.msra.mxu0 0
  %182 = vmatprep.subr.bf16.mxu0 0
  %183 = vmatpush2.bf16.msra.mxu0 0
  %184 = vmatprep.subr.bf16.mxu0 0
  %185 = vmatpush2.bf16.msra.mxu0 0
  %186 = vmatprep.subr.bf16.mxu0 0
  %187 = vmatpush2.bf16.msra.mxu0 0
  %188 = vmatprep.subr.bf16.mxu0 0
  %189 = vmatpush2.bf16.msra.mxu0 0
  %190 = vmatprep.mubr.bf16.mxu0 0
  %191 = vmatmul.mubr.bf16.gmra.mxu0 %v156
  %v192 = vpop.f32.mrf.mxu0
  %v193 = vadd.f32 %v142, %v192
  %v194 = vpop.f32.mrf.mxu0
  %v195 = vpop.f32.mrf.mxu0
  %v196 = vpop.f32.mrf.mxu0
  %197 = vdwg.mxu0
  %v198 = vxor.u32 %v193, 2147483648
  %v199 = vmul.f32 %v198, 1.442695
  %v200 = vpow.pop %v199
  %v201 = vadd.f32 %v200, 1.0
  %v202 = vrcp.pop %v201
  %v203 = vmul.f32 1.0, %v202
  %v204 = vtanh.pop %v193
  %206 = vrot.lane.b32.xlu0 %v135, 32
  %v207 = vpop.permute.xlu0 %206
  %v209 = vmul.f32 %v203, %v207
  %211 = vrot.lane.b32.xlu0 %v204, 64
  %v212 = vpop.permute.xlu0 %211
  %v214 = vmul.f32 %v203, %v212
  %216 = vrot.lane.b32.xlu0 %v214, 32
  %v217 = vpop.permute.xlu0 %216
  %v219 = vadd.f32 %v209, %v217
  %v220 = vtanh.pop %v219
  %222 = vrot.lane.b32.xlu0 %v220, 64
  %v223 = vpop.permute.xlu0 %222
  %v225 = vmul.f32 %v203, %v223
  %227 = vrot.lane.b32.xlu0 %v225, 32
  %v228 = vpop.permute.xlu0 %227
  %230 = vst.msk [vmem:[#allocation2] sm:$0xf] %vm126, %v228
  %232 = vrot.lane.b32.xlu0 %v219, 96
  %v233 = vpop.permute.xlu0 %232
  %235 = vst.msk [vmem:[#allocation3] sm:$0xf] %vm126, %v233
  %s236 = scalar_lea.vmem %s4, 4
  %237 = vst.msk [vmem:[%s236] sm:$0xf] %vm126, %v228
  %v238 = vld [vmem:[#allocation2] sm:$0xf]
  %v239 = vld [vmem:[#allocation3] sm:$0xf]
  %v240 = vpack.c.bf16 %v238, %v238
  %v241 = vld [vmem:[%s1] sm:$0xf]
  %v242 = vld [vmem:[%s1 + $0x4] sm:$0xf]
  %v243 = vld [vmem:[%s1 + $0x8] sm:$0xf]
  %v244 = vld [vmem:[%s1 + $0xc] sm:$0xf]
  %s245 = scalar_lea.vmem %s0, 8
  %v246 = vld [vmem:[%s245] sm:$0xf]
  %v251 = vunpack.c.l.b16 %v241
  %v252 = vunpack.c.l.b16 %v242
  %v253 = vunpack.c.l.b16 %v243
  %v254 = vunpack.c.l.b16 %v244
  %v255 = vpack.c.b16 %v252, %v251
  %v256 = vpack.c.b16 %v254, %v253
  %v260 = vsel %vm50, %v240, 0
  %262 = vmatprep.subr.bf16.mxu0 0
  %263 = vmatpush1.bf16.msra.mxu0 0
  %264 = vmatprep.subr.bf16.mxu0 0
  %265 = vmatpush1.bf16.msra.mxu0 0
  %266 = vmatprep.subr.bf16.mxu0 0
  %267 = vmatpush1.bf16.msra.mxu0 0
  %268 = vmatprep.subr.bf16.mxu0 0
  %269 = vmatpush1.bf16.msra.mxu0 0
  %270 = vmatprep.subr.bf16.mxu0 0
  %271 = vmatpush1.bf16.msra.mxu0 0
  %272 = vmatprep.subr.bf16.mxu0 0
  %273 = vmatpush1.bf16.msra.mxu0 0
  %274 = vmatprep.subr.bf16.mxu0 0
  %275 = vmatpush1.bf16.msra.mxu0 %v256
  %276 = vmatprep.subr.bf16.mxu0 0
  %277 = vmatpush1.bf16.msra.mxu0 %v255
  %278 = vmatprep.subr.bf16.mxu0 0
  %279 = vmatpush2.bf16.msra.mxu0 0
  %280 = vmatprep.subr.bf16.mxu0 0
  %281 = vmatpush2.bf16.msra.mxu0 0
  %282 = vmatprep.subr.bf16.mxu0 0
  %283 = vmatpush2.bf16.msra.mxu0 0
  %284 = vmatprep.subr.bf16.mxu0 0
  %285 = vmatpush2.bf16.msra.mxu0 0
  %286 = vmatprep.subr.bf16.mxu0 0
  %287 = vmatpush2.bf16.msra.mxu0 0
  %288 = vmatprep.subr.bf16.mxu0 0
  %289 = vmatpush2.bf16.msra.mxu0 0
  %290 = vmatprep.subr.bf16.mxu0 0
  %291 = vmatpush2.bf16.msra.mxu0 0
  %292 = vmatprep.subr.bf16.mxu0 0
  %293 = vmatpush2.bf16.msra.mxu0 0
  %294 = vmatprep.mubr.bf16.mxu0 0
  %295 = vmatmul.mubr.bf16.gmra.mxu0 %v260
  %v296 = vpop.f32.mrf.mxu0
  %v297 = vadd.f32 %v246, %v296
  %v298 = vpop.f32.mrf.mxu0
  %v299 = vpop.f32.mrf.mxu0
  %v300 = vpop.f32.mrf.mxu0
  %301 = vdwg.mxu0
  %v302 = vxor.u32 %v297, 2147483648
  %v303 = vmul.f32 %v302, 1.442695
  %v304 = vpow.pop %v303
  %v305 = vadd.f32 %v304, 1.0
  %v306 = vrcp.pop %v305
  %v307 = vmul.f32 1.0, %v306
  %v308 = vtanh.pop %v297
  %310 = vrot.lane.b32.xlu0 %v239, 32
  %v311 = vpop.permute.xlu0 %310
  %v313 = vmul.f32 %v307, %v311
  %315 = vrot.lane.b32.xlu0 %v308, 64
  %v316 = vpop.permute.xlu0 %315
  %v318 = vmul.f32 %v307, %v316
  %320 = vrot.lane.b32.xlu0 %v318, 32
  %v321 = vpop.permute.xlu0 %320
  %v323 = vadd.f32 %v313, %v321
  %v324 = vtanh.pop %v323
  %326 = vrot.lane.b32.xlu0 %v324, 64
  %v327 = vpop.permute.xlu0 %326
  %v329 = vmul.f32 %v307, %v327
  %331 = vrot.lane.b32.xlu0 %v329, 32
  %v332 = vpop.permute.xlu0 %331
  %334 = vst.msk [vmem:[#allocation2] sm:$0xf] %vm126, %v332
  %336 = vrot.lane.b32.xlu0 %v323, 96
  %v337 = vpop.permute.xlu0 %336
  %339 = vst.msk [vmem:[#allocation3] sm:$0xf] %vm126, %v337
  %s340 = scalar_lea.vmem %s4, 8
  %341 = vst.msk [vmem:[%s340] sm:$0xf] %vm126, %v332
  %v342 = vld [vmem:[#allocation2] sm:$0xf]
  %v343 = vld [vmem:[#allocation3] sm:$0xf]
  %v344 = vpack.c.bf16 %v342, %v342
  %v345 = vld [vmem:[%s1] sm:$0xf]
  %v346 = vld [vmem:[%s1 + $0x4] sm:$0xf]
  %v347 = vld [vmem:[%s1 + $0x8] sm:$0xf]
  %v348 = vld [vmem:[%s1 + $0xc] sm:$0xf]
  %s349 = scalar_lea.vmem %s0, 12
  %v350 = vld [vmem:[%s349] sm:$0xf]
  %v355 = vunpack.c.l.b16 %v345
  %v356 = vunpack.c.l.b16 %v346
  %v357 = vunpack.c.l.b16 %v347
  %v358 = vunpack.c.l.b16 %v348
  %v359 = vpack.c.b16 %v356, %v355
  %v360 = vpack.c.b16 %v358, %v357
  %v364 = vsel %vm50, %v344, 0
  %366 = vmatprep.subr.bf16.mxu0 0
  %367 = vmatpush1.bf16.msra.mxu0 0
  %368 = vmatprep.subr.bf16.mxu0 0
  %369 = vmatpush1.bf16.msra.mxu0 0
  %370 = vmatprep.subr.bf16.mxu0 0
  %371 = vmatpush1.bf16.msra.mxu0 0
  %372 = vmatprep.subr.bf16.mxu0 0
  %373 = vmatpush1.bf16.msra.mxu0 0
  %374 = vmatprep.subr.bf16.mxu0 0
  %375 = vmatpush1.bf16.msra.mxu0 0
  %376 = vmatprep.subr.bf16.mxu0 0
  %377 = vmatpush1.bf16.msra.mxu0 0
  %378 = vmatprep.subr.bf16.mxu0 0
  %379 = vmatpush1.bf16.msra.mxu0 %v360
  %380 = vmatprep.subr.bf16.mxu0 0
  %381 = vmatpush1.bf16.msra.mxu0 %v359
  %382 = vmatprep.subr.bf16.mxu0 0
  %383 = vmatpush2.bf16.msra.mxu0 0
  %384 = vmatprep.subr.bf16.mxu0 0
  %385 = vmatpush2.bf16.msra.mxu0 0
  %386 = vmatprep.subr.bf16.mxu0 0
  %387 = vmatpush2.bf16.msra.mxu0 0
  %388 = vmatprep.subr.bf16.mxu0 0
  %389 = vmatpush2.bf16.msra.mxu0 0
  %390 = vmatprep.subr.bf16.mxu0 0
  %391 = vmatpush2.bf16.msra.mxu0 0
  %392 = vmatprep.subr.bf16.mxu0 0
  %393 = vmatpush2.bf16.msra.mxu0 0
  %394 = vmatprep.subr.bf16.mxu0 0
  %395 = vmatpush2.bf16.msra.mxu0 0
  %396 = vmatprep.subr.bf16.mxu0 0
  %397 = vmatpush2.bf16.msra.mxu0 0
  %398 = vmatprep.mubr.bf16.mxu0 0
  %399 = vmatmul.mubr.bf16.gmra.mxu0 %v364
  %v400 = vpop.f32.mrf.mxu0
  %v401 = vadd.f32 %v350, %v400
  %v402 = vpop.f32.mrf.mxu0
  %v403 = vpop.f32.mrf.mxu0
  %v404 = vpop.f32.mrf.mxu0
  %405 = vdwg.mxu0
  %v406 = vxor.u32 %v401, 2147483648
  %v407 = vmul.f32 %v406, 1.442695
  %v408 = vpow.pop %v407
  %v409 = vadd.f32 %v408, 1.0
  %v410 = vrcp.pop %v409
  %v411 = vmul.f32 1.0, %v410
  %v412 = vtanh.pop %v401
  %414 = vrot.lane.b32.xlu0 %v343, 32
  %v415 = vpop.permute.xlu0 %414
  %v417 = vmul.f32 %v411, %v415
  %419 = vrot.lane.b32.xlu0 %v412, 64
  %v420 = vpop.permute.xlu0 %419
  %v422 = vmul.f32 %v411, %v420
  %424 = vrot.lane.b32.xlu0 %v422, 32
  %v425 = vpop.permute.xlu0 %424
  %v427 = vadd.f32 %v417, %v425
  %v428 = vtanh.pop %v427
  %430 = vrot.lane.b32.xlu0 %v428, 64
  %v431 = vpop.permute.xlu0 %430
  %v433 = vmul.f32 %v411, %v431
  %435 = vrot.lane.b32.xlu0 %v433, 32
  %v436 = vpop.permute.xlu0 %435
  %438 = vst.msk [vmem:[#allocation2] sm:$0xf] %vm126, %v436
  %440 = vrot.lane.b32.xlu0 %v427, 96
  %v441 = vpop.permute.xlu0 %440
  %443 = vst.msk [vmem:[#allocation3] sm:$0xf] %vm126, %v441
  %s444 = scalar_lea.vmem %s4, 12
  %445 = vst.msk [vmem:[%s444] sm:$0xf] %vm126, %v436
  %v446 = vld [vmem:[#allocation2] sm:$0xf]
  %v447 = vld [vmem:[#allocation3] sm:$0xf]
  %v448 = vpack.c.bf16 %v446, %v446
  %v449 = vld [vmem:[%s1] sm:$0xf]
  %v450 = vld [vmem:[%s1 + $0x4] sm:$0xf]
  %v451 = vld [vmem:[%s1 + $0x8] sm:$0xf]
  %v452 = vld [vmem:[%s1 + $0xc] sm:$0xf]
  %s453 = scalar_lea.vmem %s0, 16
  %v454 = vld [vmem:[%s453] sm:$0xf]
  %v459 = vunpack.c.l.b16 %v449
  %v460 = vunpack.c.l.b16 %v450
  %v461 = vunpack.c.l.b16 %v451
  %v462 = vunpack.c.l.b16 %v452
  %v463 = vpack.c.b16 %v460, %v459
  %v464 = vpack.c.b16 %v462, %v461
  %v468 = vsel %vm50, %v448, 0
  %470 = vmatprep.subr.bf16.mxu0 0
  %471 = vmatpush1.bf16.msra.mxu0 0
  %472 = vmatprep.subr.bf16.mxu0 0
  %473 = vmatpush1.bf16.msra.mxu0 0
  %474 = vmatprep.subr.bf16.mxu0 0
  %475 = vmatpush1.bf16.msra.mxu0 0
  %476 = vmatprep.subr.bf16.mxu0 0
  %477 = vmatpush1.bf16.msra.mxu0 0
  %478 = vmatprep.subr.bf16.mxu0 0
  %479 = vmatpush1.bf16.msra.mxu0 0
  %480 = vmatprep.subr.bf16.mxu0 0
  %481 = vmatpush1.bf16.msra.mxu0 0
  %482 = vmatprep.subr.bf16.mxu0 0
  %483 = vmatpush1.bf16.msra.mxu0 %v464
  %484 = vmatprep.subr.bf16.mxu0 0
  %485 = vmatpush1.bf16.msra.mxu0 %v463
  %486 = vmatprep.subr.bf16.mxu0 0
  %487 = vmatpush2.bf16.msra.mxu0 0
  %488 = vmatprep.subr.bf16.mxu0 0
  %489 = vmatpush2.bf16.msra.mxu0 0
  %490 = vmatprep.subr.bf16.mxu0 0
  %491 = vmatpush2.bf16.msra.mxu0 0
  %492 = vmatprep.subr.bf16.mxu0 0
  %493 = vmatpush2.bf16.msra.mxu0 0
  %494 = vmatprep.subr.bf16.mxu0 0
  %495 = vmatpush2.bf16.msra.mxu0 0
  %496 = vmatprep.subr.bf16.mxu0 0
  %497 = vmatpush2.bf16.msra.mxu0 0
  %498 = vmatprep.subr.bf16.mxu0 0
  %499 = vmatpush2.bf16.msra.mxu0 0
  %500 = vmatprep.subr.bf16.mxu0 0
  %501 = vmatpush2.bf16.msra.mxu0 0
  %502 = vmatprep.mubr.bf16.mxu0 0
  %503 = vmatmul.mubr.bf16.gmra.mxu0 %v468
  %v504 = vpop.f32.mrf.mxu0
  %v505 = vadd.f32 %v454, %v504
  %v506 = vpop.f32.mrf.mxu0
  %v507 = vpop.f32.mrf.mxu0
  %v508 = vpop.f32.mrf.mxu0
  %509 = vdwg.mxu0
  %v510 = vxor.u32 %v505, 2147483648
  %v511 = vmul.f32 %v510, 1.442695
  %v512 = vpow.pop %v511
  %v513 = vadd.f32 %v512, 1.0
  %v514 = vrcp.pop %v513
  %v515 = vmul.f32 1.0, %v514
  %v516 = vtanh.pop %v505
  %518 = vrot.lane.b32.xlu0 %v447, 32
  %v519 = vpop.permute.xlu0 %518
  %v521 = vmul.f32 %v515, %v519
  %523 = vrot.lane.b32.xlu0 %v516, 64
  %v524 = vpop.permute.xlu0 %523
  %v526 = vmul.f32 %v515, %v524
  %528 = vrot.lane.b32.xlu0 %v526, 32
  %v529 = vpop.permute.xlu0 %528
  %v531 = vadd.f32 %v521, %v529
  %v532 = vtanh.pop %v531
  %534 = vrot.lane.b32.xlu0 %v532, 64
  %v535 = vpop.permute.xlu0 %534
  %v537 = vmul.f32 %v515, %v535
  %539 = vrot.lane.b32.xlu0 %v537, 32
  %v540 = vpop.permute.xlu0 %539
  %542 = vst.msk [vmem:[#allocation2] sm:$0xf] %vm126, %v540
  %544 = vrot.lane.b32.xlu0 %v531, 96
  %v545 = vpop.permute.xlu0 %544
  %547 = vst.msk [vmem:[#allocation3] sm:$0xf] %vm126, %v545
  %s548 = scalar_lea.vmem %s4, 16
  %549 = vst.msk [vmem:[%s548] sm:$0xf] %vm126, %v540
  %v550 = vld [vmem:[#allocation2] sm:$0xf]
  %v551 = vld [vmem:[#allocation3] sm:$0xf]
  %v552 = vpack.c.bf16 %v550, %v550
  %v553 = vld [vmem:[%s1] sm:$0xf]
  %v554 = vld [vmem:[%s1 + $0x4] sm:$0xf]
  %v555 = vld [vmem:[%s1 + $0x8] sm:$0xf]
  %v556 = vld [vmem:[%s1 + $0xc] sm:$0xf]
  %s557 = scalar_lea.vmem %s0, 20
  %v558 = vld [vmem:[%s557] sm:$0xf]
  %v563 = vunpack.c.l.b16 %v553
  %v564 = vunpack.c.l.b16 %v554
  %v565 = vunpack.c.l.b16 %v555
  %v566 = vunpack.c.l.b16 %v556
  %v567 = vpack.c.b16 %v564, %v563
  %v568 = vpack.c.b16 %v566, %v565
  %v572 = vsel %vm50, %v552, 0
  %574 = vmatprep.subr.bf16.mxu0 0
  %575 = vmatpush1.bf16.msra.mxu0 0
  %576 = vmatprep.subr.bf16.mxu0 0
  %577 = vmatpush1.bf16.msra.mxu0 0
  %578 = vmatprep.subr.bf16.mxu0 0
  %579 = vmatpush1.bf16.msra.mxu0 0
  %580 = vmatprep.subr.bf16.mxu0 0
  %581 = vmatpush1.bf16.msra.mxu0 0
  %582 = vmatprep.subr.bf16.mxu0 0
  %583 = vmatpush1.bf16.msra.mxu0 0
  %584 = vmatprep.subr.bf16.mxu0 0
  %585 = vmatpush1.bf16.msra.mxu0 0
  %586 = vmatprep.subr.bf16.mxu0 0
  %587 = vmatpush1.bf16.msra.mxu0 %v568
  %588 = vmatprep.subr.bf16.mxu0 0
  %589 = vmatpush1.bf16.msra.mxu0 %v567
  %590 = vmatprep.subr.bf16.mxu0 0
  %591 = vmatpush2.bf16.msra.mxu0 0
  %592 = vmatprep.subr.bf16.mxu0 0
  %593 = vmatpush2.bf16.msra.mxu0 0
  %594 = vmatprep.subr.bf16.mxu0 0
  %595 = vmatpush2.bf16.msra.mxu0 0
  %596 = vmatprep.subr.bf16.mxu0 0
  %597 = vmatpush2.bf16.msra.mxu0 0
  %598 = vmatprep.subr.bf16.mxu0 0
  %599 = vmatpush2.bf16.msra.mxu0 0
  %600 = vmatprep.subr.bf16.mxu0 0
  %601 = vmatpush2.bf16.msra.mxu0 0
  %602 = vmatprep.subr.bf16.mxu0 0
  %603 = vmatpush2.bf16.msra.mxu0 0
  %604 = vmatprep.subr.bf16.mxu0 0
  %605 = vmatpush2.bf16.msra.mxu0 0
  %606 = vmatprep.mubr.bf16.mxu0 0
  %607 = vmatmul.mubr.bf16.gmra.mxu0 %v572
  %v608 = vpop.f32.mrf.mxu0
  %v609 = vadd.f32 %v558, %v608
  %v610 = vpop.f32.mrf.mxu0
  %v611 = vpop.f32.mrf.mxu0
  %v612 = vpop.f32.mrf.mxu0
  %613 = vdwg.mxu0
  %v614 = vxor.u32 %v609, 2147483648
  %v615 = vmul.f32 %v614, 1.442695
  %v616 = vpow.pop %v615
  %v617 = vadd.f32 %v616, 1.0
  %v618 = vrcp.pop %v617
  %v619 = vmul.f32 1.0, %v618
  %v620 = vtanh.pop %v609
  %622 = vrot.lane.b32.xlu0 %v551, 32
  %v623 = vpop.permute.xlu0 %622
  %v625 = vmul.f32 %v619, %v623
  %627 = vrot.lane.b32.xlu0 %v620, 64
  %v628 = vpop.permute.xlu0 %627
  %v630 = vmul.f32 %v619, %v628
  %632 = vrot.lane.b32.xlu0 %v630, 32
  %v633 = vpop.permute.xlu0 %632
  %v635 = vadd.f32 %v625, %v633
  %v636 = vtanh.pop %v635
  %638 = vrot.lane.b32.xlu0 %v636, 64
  %v639 = vpop.permute.xlu0 %638
  %v641 = vmul.f32 %v619, %v639
  %643 = vrot.lane.b32.xlu0 %v641, 32
  %v644 = vpop.permute.xlu0 %643
  %646 = vst.msk [vmem:[#allocation2] sm:$0xf] %vm126, %v644
  %648 = vrot.lane.b32.xlu0 %v635, 96
  %v649 = vpop.permute.xlu0 %648
  %651 = vst.msk [vmem:[#allocation3] sm:$0xf] %vm126, %v649
  %s652 = scalar_lea.vmem %s4, 20
  %653 = vst.msk [vmem:[%s652] sm:$0xf] %vm126, %v644
  %v654 = vld [vmem:[#allocation2] sm:$0xf]
  %v655 = vld [vmem:[#allocation3] sm:$0xf]
  %v656 = vpack.c.bf16 %v654, %v654
  %v657 = vld [vmem:[%s1] sm:$0xf]
  %v658 = vld [vmem:[%s1 + $0x4] sm:$0xf]
  %v659 = vld [vmem:[%s1 + $0x8] sm:$0xf]
  %v660 = vld [vmem:[%s1 + $0xc] sm:$0xf]
  %s661 = scalar_lea.vmem %s0, 24
  %v662 = vld [vmem:[%s661] sm:$0xf]
  %v667 = vunpack.c.l.b16 %v657
  %v668 = vunpack.c.l.b16 %v658
  %v669 = vunpack.c.l.b16 %v659
  %v670 = vunpack.c.l.b16 %v660
  %v671 = vpack.c.b16 %v668, %v667
  %v672 = vpack.c.b16 %v670, %v669
  %v676 = vsel %vm50, %v656, 0
  %678 = vmatprep.subr.bf16.mxu0 0
  %679 = vmatpush1.bf16.msra.mxu0 0
  %680 = vmatprep.subr.bf16.mxu0 0
  %681 = vmatpush1.bf16.msra.mxu0 0
  %682 = vmatprep.subr.bf16.mxu0 0
  %683 = vmatpush1.bf16.msra.mxu0 0
  %684 = vmatprep.subr.bf16.mxu0 0
  %685 = vmatpush1.bf16.msra.mxu0 0
  %686 = vmatprep.subr.bf16.mxu0 0
  %687 = vmatpush1.bf16.msra.mxu0 0
  %688 = vmatprep.subr.bf16.mxu0 0
  %689 = vmatpush1.bf16.msra.mxu0 0
  %690 = vmatprep.subr.bf16.mxu0 0
  %691 = vmatpush1.bf16.msra.mxu0 %v672
  %692 = vmatprep.subr.bf16.mxu0 0
  %693 = vmatpush1.bf16.msra.mxu0 %v671
  %694 = vmatprep.subr.bf16.mxu0 0
  %695 = vmatpush2.bf16.msra.mxu0 0
  %696 = vmatprep.subr.bf16.mxu0 0
  %697 = vmatpush2.bf16.msra.mxu0 0
  %698 = vmatprep.subr.bf16.mxu0 0
  %699 = vmatpush2.bf16.msra.mxu0 0
  %700 = vmatprep.subr.bf16.mxu0 0
  %701 = vmatpush2.bf16.msra.mxu0 0
  %702 = vmatprep.subr.bf16.mxu0 0
  %703 = vmatpush2.bf16.msra.mxu0 0
  %704 = vmatprep.subr.bf16.mxu0 0
  %705 = vmatpush2.bf16.msra.mxu0 0
  %706 = vmatprep.subr.bf16.mxu0 0
  %707 = vmatpush2.bf16.msra.mxu0 0
  %708 = vmatprep.subr.bf16.mxu0 0
  %709 = vmatpush2.bf16.msra.mxu0 0
  %710 = vmatprep.mubr.bf16.mxu0 0
  %711 = vmatmul.mubr.bf16.gmra.mxu0 %v676
  %v712 = vpop.f32.mrf.mxu0
  %v713 = vadd.f32 %v662, %v712
  %v714 = vpop.f32.mrf.mxu0
  %v715 = vpop.f32.mrf.mxu0
  %v716 = vpop.f32.mrf.mxu0
  %717 = vdwg.mxu0
  %v718 = vxor.u32 %v713, 2147483648
  %v719 = vmul.f32 %v718, 1.442695
  %v720 = vpow.pop %v719
  %v721 = vadd.f32 %v720, 1.0
  %v722 = vrcp.pop %v721
  %v723 = vmul.f32 1.0, %v722
  %v724 = vtanh.pop %v713
  %726 = vrot.lane.b32.xlu0 %v655, 32
  %v727 = vpop.permute.xlu0 %726
  %v729 = vmul.f32 %v723, %v727
  %731 = vrot.lane.b32.xlu0 %v724, 64
  %v732 = vpop.permute.xlu0 %731
  %v734 = vmul.f32 %v723, %v732
  %736 = vrot.lane.b32.xlu0 %v734, 32
  %v737 = vpop.permute.xlu0 %736
  %v739 = vadd.f32 %v729, %v737
  %v740 = vtanh.pop %v739
  %742 = vrot.lane.b32.xlu0 %v740, 64
  %v743 = vpop.permute.xlu0 %742
  %v745 = vmul.f32 %v723, %v743
  %747 = vrot.lane.b32.xlu0 %v745, 32
  %v748 = vpop.permute.xlu0 %747
  %750 = vst.msk [vmem:[#allocation2] sm:$0xf] %vm126, %v748
  %752 = vrot.lane.b32.xlu0 %v739, 96
  %v753 = vpop.permute.xlu0 %752
  %755 = vst.msk [vmem:[#allocation3] sm:$0xf] %vm126, %v753
  %s756 = scalar_lea.vmem %s4, 24
  %757 = vst.msk [vmem:[%s756] sm:$0xf] %vm126, %v748
  %v758 = vld [vmem:[#allocation2] sm:$0xf]
  %v759 = vld [vmem:[#allocation3] sm:$0xf]
  %v760 = vpack.c.bf16 %v758, %v758
  %v761 = vld [vmem:[%s1] sm:$0xf]
  %v762 = vld [vmem:[%s1 + $0x4] sm:$0xf]
  %v763 = vld [vmem:[%s1 + $0x8] sm:$0xf]
  %v764 = vld [vmem:[%s1 + $0xc] sm:$0xf]
  %s765 = scalar_lea.vmem %s0, 28
  %v766 = vld [vmem:[%s765] sm:$0xf]
  %v771 = vunpack.c.l.b16 %v761
  %v772 = vunpack.c.l.b16 %v762
  %v773 = vunpack.c.l.b16 %v763
  %v774 = vunpack.c.l.b16 %v764
  %v775 = vpack.c.b16 %v772, %v771
  %v776 = vpack.c.b16 %v774, %v773
  %v780 = vsel %vm50, %v760, 0
  %782 = vmatprep.subr.bf16.mxu0 0
  %783 = vmatpush1.bf16.msra.mxu0 0
  %784 = vmatprep.subr.bf16.mxu0 0
  %785 = vmatpush1.bf16.msra.mxu0 0
  %786 = vmatprep.subr.bf16.mxu0 0
  %787 = vmatpush1.bf16.msra.mxu0 0
  %788 = vmatprep.subr.bf16.mxu0 0
  %789 = vmatpush1.bf16.msra.mxu0 0
  %790 = vmatprep.subr.bf16.mxu0 0
  %791 = vmatpush1.bf16.msra.mxu0 0
  %792 = vmatprep.subr.bf16.mxu0 0
  %793 = vmatpush1.bf16.msra.mxu0 0
  %794 = vmatprep.subr.bf16.mxu0 0
  %795 = vmatpush1.bf16.msra.mxu0 %v776
  %796 = vmatprep.subr.bf16.mxu0 0
  %797 = vmatpush1.bf16.msra.mxu0 %v775
  %798 = vmatprep.subr.bf16.mxu0 0
  %799 = vmatpush2.bf16.msra.mxu0 0
  %800 = vmatprep.subr.bf16.mxu0 0
  %801 = vmatpush2.bf16.msra.mxu0 0
  %802 = vmatprep.subr.bf16.mxu0 0
  %803 = vmatpush2.bf16.msra.mxu0 0
  %804 = vmatprep.subr.bf16.mxu0 0
  %805 = vmatpush2.bf16.msra.mxu0 0
  %806 = vmatprep.subr.bf16.mxu0 0
  %807 = vmatpush2.bf16.msra.mxu0 0
  %808 = vmatprep.subr.bf16.mxu0 0
  %809 = vmatpush2.bf16.msra.mxu0 0
  %810 = vmatprep.subr.bf16.mxu0 0
  %811 = vmatpush2.bf16.msra.mxu0 0
  %812 = vmatprep.subr.bf16.mxu0 0
  %813 = vmatpush2.bf16.msra.mxu0 0
  %814 = vmatprep.mubr.bf16.mxu0 0
  %815 = vmatmul.mubr.bf16.gmra.mxu0 %v780
  %v816 = vpop.f32.mrf.mxu0
  %v817 = vadd.f32 %v766, %v816
  %v818 = vpop.f32.mrf.mxu0
  %v819 = vpop.f32.mrf.mxu0
  %v820 = vpop.f32.mrf.mxu0
  %821 = vdwg.mxu0
  %v822 = vxor.u32 %v817, 2147483648
  %v823 = vmul.f32 %v822, 1.442695
  %v824 = vpow.pop %v823
  %v825 = vadd.f32 %v824, 1.0
  %v826 = vrcp.pop %v825
  %v827 = vmul.f32 1.0, %v826
  %v828 = vtanh.pop %v817
  %830 = vrot.lane.b32.xlu0 %v759, 32
  %v831 = vpop.permute.xlu0 %830
  %v833 = vmul.f32 %v827, %v831
  %835 = vrot.lane.b32.xlu0 %v828, 64
  %v836 = vpop.permute.xlu0 %835
  %v838 = vmul.f32 %v827, %v836
  %840 = vrot.lane.b32.xlu0 %v838, 32
  %v841 = vpop.permute.xlu0 %840
  %v843 = vadd.f32 %v833, %v841
  %v844 = vtanh.pop %v843
  %846 = vrot.lane.b32.xlu0 %v844, 64
  %v847 = vpop.permute.xlu0 %846
  %v849 = vmul.f32 %v827, %v847
  %851 = vrot.lane.b32.xlu0 %v849, 32
  %v852 = vpop.permute.xlu0 %851
  %854 = vst.msk [vmem:[#allocation2] sm:$0xf] %vm126, %v852
  %856 = vrot.lane.b32.xlu0 %v843, 96
  %v857 = vpop.permute.xlu0 %856
  %859 = vst.msk [vmem:[#allocation3] sm:$0xf] %vm126, %v857
  %s860 = scalar_lea.vmem %s4, 28
  %861 = vst.msk [vmem:[%s860] sm:$0xf] %vm126, %v852
  // Predicated region
  $region22: #{tedlium_forward.6} parent=0 // pred_check
    %p862 = pneg %p21
  $region23: #{tedlium_forward.6} parent=0 // pred_check_branch
    %864 = sbr.rel (%p862) target = $region25
  $region24: #{tedlium_forward.6} parent=0 // pred_region
    %v865 = vld [vmem:[#allocation2] sm:$0xf]
    %866 = vst.msk [vmem:[%s5] sm:$0xf] %vm126, %v865
    %v867 = vld [vmem:[#allocation3] sm:$0xf]
    %868 = vst.msk [vmem:[%s6] sm:$0xf] %vm126, %v867
  $region25: #{tedlium_forward.6} parent=0 // pred_fallthru
    _
  // Predicated region
  $region26: #{tedlium_forward.6} parent=0 // pred_check
    _
  $region27: #{tedlium_forward.6} parent=0 // pred_check_branch
    %870 = sbr.rel (0) target = $region29
  $region28: #{tedlium_forward.6} parent=0 // pred_region
    _
  $region29: #{tedlium_forward.6} parent=0 // pred_fallthru
    _
  // Predicated region
  $region30: #{tedlium_forward.6} parent=0 // pred_check
    _
  $region31: #{tedlium_forward.6} parent=0 // pred_check_branch
    %872 = sbr.rel (0) target = $region33
  $region32: #{tedlium_forward.6} parent=0 // pred_region
    _
  $region33: #{tedlium_forward.6} parent=0 // pred_fallthru
    _
  // Predicated region
  $region34: #{tedlium_forward.6} parent=0 // pred_check
    _
  $region35: #{tedlium_forward.6} parent=0 // pred_check_branch
    %874 = sbr.rel (0) target = $region37
  $region36: #{tedlium_forward.6} parent=0 // pred_region
    _
  $region37: #{tedlium_forward.6} parent=0 // pred_fallthru
    _
  // Predicated region
  $region38: #{tedlium_forward.6} parent=0 // pred_check
    _
  $region39: #{tedlium_forward.6} parent=0 // pred_check_branch
    %876 = sbr.rel (0) target = $region41
  $region40: #{tedlium_forward.6} parent=0 // pred_region
    _
  $region41: #{tedlium_forward.6} parent=0 // pred_fallthru
    _
  // Predicated region
  $region42: #{tedlium_forward.6} parent=0 // pred_check
    _
  $region43: #{tedlium_forward.6} parent=0 // pred_check_branch
    %878 = sbr.rel (0) target = $region45
  $region44: #{tedlium_forward.6} parent=0 // pred_region
    _
  $region45: #{tedlium_forward.6} parent=0 // pred_fallthru
    _
  // Predicated region
  $region46: #{tedlium_forward.6} parent=0 // pred_check
    _
  $region47: #{tedlium_forward.6} parent=0 // pred_check_branch
    %880 = sbr.rel (0) target = $region49
  $region48: #{tedlium_forward.6} parent=0 // pred_region
    _
  $region49: #{tedlium_forward.6} parent=0 // pred_fallthru
    _

</llo_original>
